<compile_context>
chip_gen: v7x
topology: tpu7x:2x2x1
jax: 0.10.0
libtpu: 0.0.40
codegen_flags: <defaults>
</compile_context>

<pallas_src>
import math

import jax
import jax.numpy as jnp
from jax.experimental import pallas as pl
from jax.experimental.pallas import tpu as pltpu


def _round_up(x, d):
    return ((x + d - 1) // d) * d


def _pack_factor(n, c):
    """Rows packed per lane-row.  Prefer g with (g*c) % 128 == 0 and g | n."""
    g0 = 128 // math.gcd(c, 128)
    if n % g0 == 0 and g0 * c <= 4096:
        return g0
    # Fallback: largest power-of-two divisor of n with a modest packed width.
    g = 1
    while (g * 2) * c <= 1024 and n % (g * 2) == 0:
        g *= 2
    return g


def _nll_kernel(pred_ref, pick_ref, sel_ref, out_ref, acc_ref):
    i = pl.program_id(1)

    @pl.when(i == 0)
    def _init():
        acc_ref[...] = jnp.zeros_like(acc_ref)

    # d[r, l] = target_lane(r, slot(l)) - l ; equals 0 exactly at the lane
    # holding pred[row, target[row]].  Sentinel rows give -1 - l (never 0).
    pick = pick_ref[...].astype(jnp.int32).astype(jnp.float32)        # (tr, K)
    d = jnp.dot(pick, sel_ref[...], preferred_element_type=jnp.float32)  # (tr, w)

    pred = pred_ref[...]                                              # native dtype
    picked = jnp.where(d == 0.0, pred, jnp.zeros((), pred.dtype))
    acc_ref[...] += jnp.sum(picked.astype(jnp.float32), axis=0, keepdims=True)

    @pl.when(i == pl.num_programs(1) - 1)
    def _finalize():
        out_ref[...] = jnp.full((8, 128), jnp.sum(acc_ref[...]), jnp.float32)


def nll_loss(pred, target, trans_feat=None, *, tile_bytes=4 << 20):
    """pred: (N, C) log-probs (any float dtype); target: (N,) ints.

    Returns the scalar f32 mean NLL loss, matching F.nll_loss(pred, target).
    """
    del trans_feat  # unused by the reference module's forward
    n, c = pred.shape
    itemsize = jnp.dtype(pred.dtype).itemsize

    # --- lane packing: (n, c) -> (m, w), w a multiple of 128 when possible.
    g = _pack_factor(n, c)
    m = n // g
    w = g * c
    pred_packed = pred.reshape(m, w)            # free, contiguous reshape

    # --- row tiling: ~tile_bytes of pred per grid step, rows multiple of 16.
    bytes_per_row = w * itemsize
    tr = max(16, (tile_bytes // max(bytes_per_row, 1)) // 16 * 16)
    tr = min(tr, _round_up(m, 16))
    grid_n = pl.cdiv(m, tr)                     # real row blocks
    half = (grid_n + 1) // 2                    # inner steps per TensorCore
    cols = 2 * half * tr                        # padded packed-row extent

    # --- gather operands -----------------------------------------------------
    # pick[r] = [target[r*g + j] + j*c  for j < g] ++ [1]   (int16, K = g+1)
    # padded rows use sentinel lane -1 so they never match and contribute 0.
    K = g + 1
    tgt = target.astype(jnp.int32).reshape(m, g)
    lanes = tgt + jnp.arange(g, dtype=jnp.int32)[None, :] * c          # (m, g)
    pick = jnp.full((cols, K), -1, dtype=jnp.int16)
    pick = pick.at[:, g].set(jnp.int16(1))
    pick = pick.at[:m, :g].set(lanes.astype(jnp.int16))

    # sel = [one-hot(slot) rows ; -lane row]:  dot(pick, sel) = target_lane - lane
    slot = jnp.arange(w, dtype=jnp.int32) // c
    sel = jnp.zeros((K, w), dtype=jnp.float32)
    sel = sel.at[:g, :].set(
        (jnp.arange(g, dtype=jnp.int32)[:, None] == slot[None, :]).astype(jnp.float32))
    sel = sel.at[g, :].set(-jnp.arange(w, dtype=jnp.float32))

    cost = pl.CostEstimate(
        flops=2 * K * w * cols + 4 * n * c,
        transcendentals=0,
        bytes_accessed=n * c * itemsize + cols * K * 2 + K * w * 4 + 16 * 128 * 4,
    )

    partials = pl.pallas_call(
        _nll_kernel,
        out_shape=jax.ShapeDtypeStruct((16, 128), jnp.float32),
        grid=(2, half),
        in_specs=[
            # pred row blocks; clamp so any trailing (empty) block of core 1
            # re-reads a valid block -- its pick rows are all sentinels.
            pl.BlockSpec(
                (tr, w),
                lambda core, i: (jnp.minimum(core * half + i, grid_n - 1), 0)),
            # packed target lanes, K-wide minor axis (int16).
            pl.BlockSpec((tr, K), lambda core, i: (core * half + i, 0)),
            # small constant selection matrix, resident (DMA'd once).
            pl.BlockSpec((K, w), lambda core, i: (0, 0)),
        ],
        out_specs=pl.BlockSpec((8, 128), lambda core, i: (core, 0)),
        scratch_shapes=[pltpu.VMEM((1, w), jnp.float32)],
        compiler_params=pltpu.CompilerParams(
            dimension_semantics=("parallel", "arbitrary"),
            vmem_limit_bytes=32 * 1024 * 1024,
        ),
        cost_estimate=cost,
    )(pred_packed, pick, sel)

    return (partials[0, 0] + partials[8, 0]) * jnp.float32(-1.0 / n)


if __name__ == "__main__":
    key = jax.random.PRNGKey(0)
    k1, k2, k3 = jax.random.split(key, 3)

    def ref_loss(p, t):
        return -jnp.mean(p[jnp.arange(p.shape[0]), t])

    # Primary: part-seg-like shapes -- batch=2, 64 points, 50 part classes.
    N, C = 2 * 64, 50
    pred = jax.nn.log_softmax(jax.random.normal(k1, (N, C), jnp.float32), axis=-1)
    target = jax.random.randint(k2, (N,), 0, C, dtype=jnp.int32)
    trans_feat = jax.random.normal(k3, (2, 16, 16), jnp.float32)  # unused by get_loss
    loss = jax.block_until_ready(nll_loss(pred, target, trans_feat))
    ref = ref_loss(pred, target)
    assert jnp.allclose(loss, ref, atol=1e-5, rtol=1e-5), (loss, ref)

    # Multi-block grid + dual-core row split + remainder sentinels.
    N2, C2 = 4000, 16
    pred2 = jax.nn.log_softmax(jax.random.normal(k1, (N2, C2), jnp.float32), axis=-1)
    target2 = jax.random.randint(k2, (N2,), 0, C2, dtype=jnp.int32)
    loss2 = jax.block_until_ready(nll_loss(pred2, target2, None, tile_bytes=65536))
    ref2 = ref_loss(pred2, target2)
    assert jnp.allclose(loss2, ref2, atol=1e-5, rtol=1e-5), (loss2, ref2)

    # Fallback packing path (g0 does not divide N).
    N3, C3 = 100, 16
    pred3 = jax.nn.log_softmax(jax.random.normal(k1, (N3, C3), jnp.float32), axis=-1)
    target3 = jax.random.randint(k2, (N3,), 0, C3, dtype=jnp.int32)
    loss3 = jax.block_until_ready(nll_loss(pred3, target3))
    ref3 = ref_loss(pred3, target3)
    assert jnp.allclose(loss3, ref3, atol=1e-5, rtol=1e-5), (loss3, ref3)

    print("KERNEL_OK")
</pallas_src>

<mosaic_0001>
module attributes {stable_mosaic.version = 11 : i64} {
  func.func @_nll_kernel(%arg0: i32, %arg1: i32, %arg2: memref<16x3200xf32, #tpu.memory_space<vmem>>, %arg3: memref<16x65xi16, #tpu.memory_space<vmem>>, %arg4: memref<65x3200xf32, #tpu.memory_space<vmem>>, %arg5: memref<8x128xf32, #tpu.memory_space<vmem>>, %arg6: memref<1x3200xf32, #tpu.memory_space<vmem>>) attributes {dimension_semantics = [#tpu.dimension_semantics<parallel>, #tpu.dimension_semantics<arbitrary>], iteration_bounds = array<i64: 2, 1>, scalar_prefetch = 0 : i64, scratch_operands = 1 : i64, tpu.core_type = #tpu.core_type<tc>, window_params = [{transform_indices = @transform_0, window_bounds = array<i64: 16, 3200>}, {transform_indices = @transform_1, window_bounds = array<i64: 16, 65>}, {pipeline_mode = #tpu.pipeline_mode<synchronous>, transform_indices = @transform_2, window_bounds = array<i64: 65, 3200>}, {transform_indices = @transform_3, window_bounds = array<i64: 8, 128>}]} {
    %c0_i32 = arith.constant 0 : i32
    %0 = arith.cmpi eq, %arg1, %c0_i32 : i32
    %1 = arith.extui %0 : i1 to i32
    %c0_i32_0 = arith.constant 0 : i32
    %2 = arith.cmpi ne, %1, %c0_i32_0 : i32
    scf.if %2 {
      %cst_15 = arith.constant 0.000000e+00 : f32
      %21 = vector.broadcast %cst_15 : f32 to vector<1x3200xf32>
      %c0_16 = arith.constant 0 : index
      %c0_17 = arith.constant 0 : index
      %22 = vector.load %arg6[%c0_16, %c0_17] : memref<1x3200xf32, #tpu.memory_space<vmem>>, vector<1x3200xf32>
      tpu.vector_store %arg6[%c0_16, %c0_17], %21 {strides = array<i32>} : memref<1x3200xf32, #tpu.memory_space<vmem>>, vector<1x3200xf32>,
    } else {
    }
    %c0 = arith.constant 0 : index
    %c0_1 = arith.constant 0 : index
    %3 = vector.load %arg3[%c0, %c0_1] : memref<16x65xi16, #tpu.memory_space<vmem>>, vector<16x65xi16>
    %4 = arith.extsi %3 : vector<16x65xi16> to vector<16x65xi32>
    %5 = arith.sitofp %4 : vector<16x65xi32> to vector<16x65xf32>
    %c0_2 = arith.constant 0 : index
    %c0_3 = arith.constant 0 : index
    %6 = vector.load %arg4[%c0_2, %c0_3] : memref<65x3200xf32, #tpu.memory_space<vmem>>, vector<65x3200xf32>
    %cst = arith.constant dense<0.000000e+00> : vector<16x3200xf32>
    %7 = tpu.matmul %5, %6, %cst {dimension_numbers = #tpu.dot_dimension_numbers<[1], [0], [0], [1], [0, 0, 1, 1], [], []>} : vector<16x65xf32>, vector<65x3200xf32>, vector<16x3200xf32> -> vector<16x3200xf32>
    %c0_4 = arith.constant 0 : index
    %c0_5 = arith.constant 0 : index
    %8 = vector.load %arg2[%c0_4, %c0_5] : memref<16x3200xf32, #tpu.memory_space<vmem>>, vector<16x3200xf32>
    %cst_6 = arith.constant 0.000000e+00 : f32
    %9 = vector.broadcast %cst_6 : f32 to vector<16x3200xf32>
    %10 = arith.cmpf oeq, %7, %9 : vector<16x3200xf32>
    %cst_7 = arith.constant 0.000000e+00 : f32
    %11 = vector.broadcast %cst_7 : f32 to vector<16x3200xf32>
    %12 = arith.select %10, %8, %11 : vector<16x3200xi1>, vector<16x3200xf32>
    %c0_8 = arith.constant 0 : index
    %c0_9 = arith.constant 0 : index
    %13 = vector.load %arg6[%c0_8, %c0_9] : memref<1x3200xf32, #tpu.memory_space<vmem>>, vector<1x3200xf32>
    %cst_10 = arith.constant dense<0.000000e+00> : vector<3200xf32>
    %14 = vector.multi_reduction <add>, %12, %cst_10 [0] : vector<16x3200xf32> to vector<3200xf32>
    %15 = vector.shape_cast %14 : vector<3200xf32> to vector<1x3200xf32>
    %16 = arith.addf %13, %15 : vector<1x3200xf32>
    %c0_11 = arith.constant 0 : index
    %c0_12 = arith.constant 0 : index
    %17 = vector.load %arg6[%c0_11, %c0_12] : memref<1x3200xf32, #tpu.memory_space<vmem>>, vector<1x3200xf32>
    tpu.vector_store %arg6[%c0_11, %c0_12], %16 {strides = array<i32>} : memref<1x3200xf32, #tpu.memory_space<vmem>>, vector<1x3200xf32>,
    %c0_i32_13 = arith.constant 0 : i32
    %18 = arith.cmpi eq, %arg1, %c0_i32_13 : i32
    %19 = arith.extui %18 : i1 to i32
    %c0_i32_14 = arith.constant 0 : i32
    %20 = arith.cmpi ne, %19, %c0_i32_14 : i32
    scf.if %20 {
      %c0_15 = arith.constant 0 : index
      %c0_16 = arith.constant 0 : index
      %21 = vector.load %arg6[%c0_15, %c0_16] : memref<1x3200xf32, #tpu.memory_space<vmem>>, vector<1x3200xf32>
      %22 = vector.shape_cast %21 : vector<1x3200xf32> to vector<1x1x3200xf32>
      %cst_17 = arith.constant dense<0.000000e+00> : vector<1xf32>
      %23 = vector.multi_reduction <add>, %22, %cst_17 [1, 2] : vector<1x1x3200xf32> to vector<1xf32>
      %24 = vector.shape_cast %23 : vector<1xf32> to vector<1x1x1xf32>
      %25 = vector.extract %24[0, 0, 0] : f32 from vector<1x1x1xf32>
      %26 = vector.broadcast %25 : f32 to vector<8x128xf32>
      %c0_18 = arith.constant 0 : index
      %c0_19 = arith.constant 0 : index
      %27 = vector.load %arg5[%c0_18, %c0_19] : memref<8x128xf32, #tpu.memory_space<vmem>>, vector<8x128xf32>
      tpu.vector_store %arg5[%c0_18, %c0_19], %26 {strides = array<i32>} : memref<8x128xf32, #tpu.memory_space<vmem>>, vector<8x128xf32>,
    } else {
    }
    return
  }
  func.func @transform_0(%arg0: i32, %arg1: i32) -> (i32, i32) {
    %c1_i32 = arith.constant 1 : i32
    %0 = arith.muli %arg0, %c1_i32 : i32
    %1 = arith.addi %0, %arg1 : i32
    %c0_i32 = arith.constant 0 : i32
    %2 = arith.minsi %1, %c0_i32 : i32
    %c0_i32_0 = arith.constant 0 : i32
    %c0_i32_1 = arith.constant 0 : i32
    return %2, %c0_i32_0 : i32, i32
  }
  func.func @transform_1(%arg0: i32, %arg1: i32) -> (i32, i32) {
    %c1_i32 = arith.constant 1 : i32
    %0 = arith.muli %arg0, %c1_i32 : i32
    %1 = arith.addi %0, %arg1 : i32
    %c0_i32 = arith.constant 0 : i32
    %c0_i32_0 = arith.constant 0 : i32
    return %1, %c0_i32 : i32, i32
  }
  func.func @transform_2(%arg0: i32, %arg1: i32) -> (i32, i32) {
    %c0_i32 = arith.constant 0 : i32
    %c0_i32_0 = arith.constant 0 : i32
    %c0_i32_1 = arith.constant 0 : i32
    return %c0_i32, %c0_i32_0 : i32, i32
  }
  func.func @transform_3(%arg0: i32, %arg1: i32) -> (i32, i32) {
    %c0_i32 = arith.constant 0 : i32
    %c0_i32_0 = arith.constant 0 : i32
    return %arg0, %c0_i32 : i32, i32
  }
}

</mosaic_0001>

<llo_original>
// kernel: tpu_custom_call.1
$region0: #{tpu_custom_call.1}
  #allocation0 [shape = 'u32[]', space=smem, size = 0x4, offset = 0x4, fixed_abs, tag = 'smem constant byte address 0x4 - core index']
  #allocation1 [shape = 'u32[144,128]{1,0:T(1,128)}', space=vmem, size = 0x12000, scoped, tag = 'internal scratch']
  #allocation2 [shape = 'f32[1,3200]{1,0:T(1,128)}', space=vmem, size = 0x3200, scoped, tag = 'scratch operand']
  %s0 = inlined_call_operand.hbm [shape: f32[2,3200], index: 0, kind: input, shape index: {}]
  %s1 = inlined_call_operand.hbm [shape: s16[32,65], index: 1, kind: input, shape index: {}]
  %s2 = inlined_call_operand.hbm [shape: f32[65,3200], index: 2, kind: input, shape index: {}]
  %s3 = inlined_call_operand.hbm [shape: f32[16,128], index: 3, kind: output, shape index: {}]
  %s4 = sld [smem:[#allocation0]]
  $region65: #{tpu_custom_call.1} parent=0
    _
  %s6 = ssub.s32 1, %s4
  %s7 = scalar_select 0, %s6, %s4
  $region1: #{tpu_custom_call.1} parent=0
    #allocation3 [shape = 'u8[409600]{0}', space=vmem, size = 0x64000, scoped, tag = 'input window, operand 0']
    #allocation4 [shape = 's32[2]{0}', space=sflag, size = 0x8, scoped, tag = 'scoped memory for tpu_custom_call.1']
    #allocation5 [shape = 's32[2]{0}', space=sflag, size = 0x8, scoped, tag = 'scoped memory for tpu_custom_call.1']
    #allocation6 [shape = 'u8[8192]{0}', space=vmem, size = 0x2000, scoped, tag = 'input window, operand 1']
    #allocation7 [shape = 's32[2]{0}', space=sflag, size = 0x8, scoped, tag = 'scoped memory for tpu_custom_call.1']
    #allocation8 [shape = 'u8[921600]{0}', space=vmem, size = 0xe1000, scoped, tag = 'input window, operand 2, single buffered']
    #allocation9 [shape = 'u8[8192]{0}', space=vmem, size = 0x2000, scoped, tag = 'output window, operand 0']
    %8 = vsyncpa [#allocation4], 0
    %s9 = scalar_lea.sflag [#allocation4], 1
    %10 = vsyncpa %s9, 0
    %11 = vsyncpa [#allocation7], 0
    %s12 = scalar_lea.sflag [#allocation7], 1
    %13 = vsyncpa %s12, 0
    %14 = vsyncpa [#allocation5], 0
    %s15 = scalar_lea.sflag [#allocation5], 1
    %16 = vsyncpa %s15, 0
    loop: start=0, step=1, limit=4
    $region2: #{tpu_custom_call.1} parent=1 // loop_pre_header
      _
    $region3: #{tpu_custom_call.1} parent=1 // loop_header
      %s18 = sphi 0, %s22
      %p19 = scmp.ge.s32.totalorder %s18, 4
      %s25 = sphi 0, %s37
      %s26 = sphi 0, %s33
      %s27 = sphi 0, %s25
      %s28 = sphi 0, %s26
      %s29 = sphi 0, %s27
      %s30 = sphi 0, %s28
      %s46 = sphi 0, %s48
      %s49 = sphi 0, %s46
      %s50 = sphi 0, %s49
      %s66 = sphi 0, %s50
      %s74 = sphi 0, %s76
      %s77 = sphi 0, %s74
      %s78 = sphi 0, %s77
      %s94 = sphi 0, %s78
      %s98 = sphi 0, %s98
      %s100 = sphi 0, %s98
      %s101 = sphi 0, %s100
      %s115 = sphi 0, %s101
      %s121 = sphi 0, %s123
      %s124 = sphi 0, %s121
      %s125 = sphi 0, %s124
      %s141 = sphi 0, %s125
    $region4: #{tpu_custom_call.1} parent=1 // loop_header_branch
      %21 = sbr.rel (%p19) target = $region8
    $region5: #{tpu_custom_call.1} parent=1 // loop_body
      %s23 = ssub.s32 %s18, 1
      %s24 = ssub.s32 %s18, 2
      %s31 = sadd.s32 1, %s26
      %p32 = scmp.ge.s32.totalorder %s31, 1
      %s33 = scalar_select %p32, 0, %s31
      %s34 = sadd.s32 1, %s25
      %s35 = scalar_select %p32, %s34, %s25
      %p36 = scmp.ge.s32.totalorder %s35, 2
      %s37 = scalar_select %p36, 0, %s35
      %s38 = sadd.s32 %s25, %s26
      %p39 = scmp.lt.s32.totalorder %s38, 0
      %s40 = scalar_select %p39, %s38, 0
      %s41 = sadd.s32 %s37, %s33
      %p42 = scmp.lt.s32.totalorder %s41, 0
      %s43 = scalar_select %p42, %s41, 0
      %s44 = ssub.s32 %s40, %s43
      %p45 = scmp.eq.s32.totalorder %s44, 0
      %s47 = sadd.s32 %s46, 1
      %s48 = scalar_select %p45, %s46, %s47
      %p51 = pneg %p45
      %p52 = scmp.eq.s32.totalorder %s18, 1
      %p53 = por %p51, %p52
      %p54 = scmp.ne.s32.totalorder %s46, %s49
      %p55 = scmp.eq.s32.totalorder %s18, 0
      %p56 = por %p54, %p55
      %p57 = scmp.ne.s32.totalorder %s46, %s49
      %p58 = scmp.eq.s32.totalorder %s23, 1
      %p59 = por %p57, %p58
      %p60 = scmp.ne.s32.totalorder %s49, %s50
      %p61 = scmp.eq.s32.totalorder %s23, 0
      %p62 = por %p60, %p61
      %p63 = scmp.ne.s32.totalorder %s49, %s50
      %p64 = scmp.eq.s32.totalorder %s24, 1
      %p65 = por %p63, %p64
      %p67 = scmp.ne.s32.totalorder %s50, %s66
      %p68 = scmp.eq.s32.totalorder %s24, 0
      %p69 = por %p67, %p68
      %s70 = sadd.s32 %s25, %s26
      %s71 = sadd.s32 %s37, %s33
      %s72 = ssub.s32 %s70, %s71
      %p73 = scmp.eq.s32.totalorder %s72, 0
      %s75 = sadd.s32 %s74, 1
      %s76 = scalar_select %p73, %s74, %s75
      %p79 = pneg %p73
      %p80 = scmp.eq.s32.totalorder %s18, 1
      %p81 = por %p79, %p80
      %p82 = scmp.ne.s32.totalorder %s74, %s77
      %p83 = scmp.eq.s32.totalorder %s18, 0
      %p84 = por %p82, %p83
      %p85 = scmp.ne.s32.totalorder %s74, %s77
      %p86 = scmp.eq.s32.totalorder %s23, 1
      %p87 = por %p85, %p86
      %p88 = scmp.ne.s32.totalorder %s77, %s78
      %p89 = scmp.eq.s32.totalorder %s23, 0
      %p90 = por %p88, %p89
      %p91 = scmp.ne.s32.totalorder %s77, %s78
      %p92 = scmp.eq.s32.totalorder %s24, 1
      %p93 = por %p91, %p92
      %p95 = scmp.ne.s32.totalorder %s78, %s94
      %p96 = scmp.eq.s32.totalorder %s24, 0
      %p97 = por %p95, %p96
      %s99 = sadd.s32 %s98, 1
      %p102 = scmp.eq.s32.totalorder %s18, 1
      %p103 = scmp.ne.s32.totalorder %s98, %s100
      %p104 = scmp.eq.s32.totalorder %s18, 0
      %p105 = por %p103, %p104
      %p106 = scmp.ne.s32.totalorder %s98, %s100
      %p107 = scmp.eq.s32.totalorder %s23, 1
      %p108 = por %p106, %p107
      %p109 = scmp.ne.s32.totalorder %s100, %s101
      %p110 = scmp.eq.s32.totalorder %s23, 0
      %p111 = por %p109, %p110
      %p112 = scmp.ne.s32.totalorder %s100, %s101
      %p113 = scmp.eq.s32.totalorder %s24, 1
      %p114 = por %p112, %p113
      %p116 = scmp.ne.s32.totalorder %s101, %s115
      %p117 = scmp.eq.s32.totalorder %s24, 0
      %p118 = por %p116, %p117
      %s119 = ssub.s32 %s25, %s37
      %p120 = scmp.eq.s32.totalorder %s119, 0
      %s122 = sadd.s32 %s121, 1
      %s123 = scalar_select %p120, %s121, %s122
      %p126 = pneg %p120
      %p127 = scmp.eq.s32.totalorder %s18, 1
      %p128 = por %p126, %p127
      %p129 = scmp.ne.s32.totalorder %s121, %s124
      %p130 = scmp.eq.s32.totalorder %s18, 0
      %p131 = por %p129, %p130
      %p132 = scmp.ne.s32.totalorder %s121, %s124
      %p133 = scmp.eq.s32.totalorder %s23, 1
      %p134 = por %p132, %p133
      %p135 = scmp.ne.s32.totalorder %s124, %s125
      %p136 = scmp.eq.s32.totalorder %s23, 0
      %p137 = por %p135, %p136
      %p138 = scmp.ne.s32.totalorder %s124, %s125
      %p139 = scmp.eq.s32.totalorder %s24, 1
      %p140 = por %p138, %p139
      %p142 = scmp.ne.s32.totalorder %s125, %s141
      %p143 = scmp.eq.s32.totalorder %s24, 0
      %p144 = por %p142, %p143
      %p145 = scmp.le.s32.totalorder 1, %s18
      %p146 = scmp.lt.s32.totalorder %s18, 3
      %p147 = pnand %p145, %p146
      %p148 = pneg %p147
      // Predicated region
      $region9: #{tpu_custom_call.1} parent=5 // pred_check
        _
      $region10: #{tpu_custom_call.1} parent=5 // pred_check_branch
        %150 = sbr.rel (%p147) target = $region12
      $region11: #{tpu_custom_call.1} parent=5 // pred_region
        %s151 = ssub.s32 %s18, 1
        // Predicated region
        $region13: #{tpu_custom_call.1} parent=11 // pred_check
          %p152 = pneg %p111
        $region14: #{tpu_custom_call.1} parent=11 // pred_check_branch
          %154 = sbr.rel (%p152) target = $region16
        $region15: #{tpu_custom_call.1} parent=11 // pred_region
          %s156 = ssub.s32 28800, 28800
          %157 = vsyncadd [#allocation7], %s156
          %s158 = sshll.u32 [#allocation8], 4
          %s159 = int_to_ptr.vmem [resolvable:$true] %s158
          %164 = dma.hbm_to_vmem [thread:$0]  %s2, 28800, %s159, [#allocation7], 3200, 3200, 200
        $region16: #{tpu_custom_call.1} parent=11 // pred_fallthru
          _
      $region12: #{tpu_custom_call.1} parent=5 // pred_fallthru
        _
      %p165 = scmp.lt.s32.totalorder %s18, 2
      // Predicated region
      $region17: #{tpu_custom_call.1} parent=5 // pred_check
        %p166 = pneg %p165
      $region18: #{tpu_custom_call.1} parent=5 // pred_check_branch
        %168 = sbr.rel (%p166) target = $region20
      $region19: #{tpu_custom_call.1} parent=5 // pred_region
        // Predicated region
        $region21: #{tpu_custom_call.1} parent=19 // pred_check
          %p169 = pneg %p56
        $region22: #{tpu_custom_call.1} parent=19 // pred_check_branch
          %171 = sbr.rel (%p169) target = $region24
        $region23: #{tpu_custom_call.1} parent=19 // pred_region
          %s172 = sand.u32 %s46, 1
          %s173 = scalar_lea.sflag [#allocation4], %s172
          %s174 = sand.u32 %s46, 1
          %s175 = smul.addr %s174, 400
          %s176 = scalar_lea.vmem [#allocation3], %s175
          %s177 = sadd.s32 %s25, %s26
          %p178 = scmp.lt.s32.totalorder %s177, 0
          %s179 = scalar_select %p178, %s177, 0
          %s180 = smul.u32 8, %s179
          %s181 = ssub.s32 1, %s180
          %s182 = smul.u32 32, %s181
          %s183 = smul.u32 %s182, 25
          %s185 = ssub.s32 6400, %s183
          %186 = vsyncadd %s173, %s185
          %p187 = scmp.ne.s32.totalorder 0, %s183
          %s188 = smul.addr %s180, 25
          %s189 = smul.addr %s188, 32
          %s190 = scalar_lea.hbm %s0, %s189
          %s191 = smul.u32 50, %s181
          %s192 = sshll.u32 %s176, 4
          %s193 = int_to_ptr.vmem [resolvable:$true] %s192
          %s194 = sshll.u32 %s191, 4
          %198 = dma.hbm_to_vmem [thread:$0]  (%p187), %s190, %s194, %s193, %s173, 800, 800, 50
        $region24: #{tpu_custom_call.1} parent=19 // pred_fallthru
          _
        // Predicated region
        $region25: #{tpu_custom_call.1} parent=19 // pred_check
          %p199 = pneg %p84
        $region26: #{tpu_custom_call.1} parent=19 // pred_check_branch
          %201 = sbr.rel (%p199) target = $region28
        $region27: #{tpu_custom_call.1} parent=19 // pred_region
          %s202 = sand.u32 %s18, 1
          %s203 = scalar_lea.sflag [#allocation7], %s202
          %s204 = sand.u32 %s74, 1
          %s205 = smul.addr %s204, 8
          %s206 = scalar_lea.vmem [#allocation6], %s205
          %s207 = sadd.s32 %s25, %s26
          %s208 = smul.u32 2, %s207
          %s210 = ssub.s32 128, 128
          %211 = vsyncadd %s203, %s210
          %s212 = smul.addr %s208, 64
          %s213 = scalar_lea.hbm %s1, %s212
          %s214 = sshll.u32 %s206, 4
          %s215 = int_to_ptr.vmem [resolvable:$true] %s214
          %220 = dma.hbm_to_vmem [thread:$0]  %s213, 128, %s215, %s203, 64, 64, 4
        $region28: #{tpu_custom_call.1} parent=19 // pred_fallthru
          _
      $region20: #{tpu_custom_call.1} parent=5 // pred_fallthru
        _
      %p221 = scmp.le.s32.totalorder 1, %s18
      %p222 = scmp.lt.s32.totalorder %s18, 3
      %p223 = pnand %p221, %p222
      %p224 = pneg %p223
      // Predicated region
      $region29: #{tpu_custom_call.1} parent=5 // pred_check
        _
      $region30: #{tpu_custom_call.1} parent=5 // pred_check_branch
        %226 = sbr.rel (%p223) target = $region32
      $region31: #{tpu_custom_call.1} parent=5 // pred_region
        %s227 = ssub.s32 %s18, 1
        %s228 = sand.u32 %s49, 1
        %s229 = scalar_lea.sflag [#allocation4], %s228
        %s230 = sand.u32 %s49, 1
        %s231 = smul.addr %s230, 400
        %s232 = scalar_lea.vmem [#allocation3], %s231
        // Predicated region
        $region33: #{tpu_custom_call.1} parent=31 // pred_check
          %p233 = pneg %p62
        $region34: #{tpu_custom_call.1} parent=31 // pred_check_branch
          %235 = sbr.rel (%p233) target = $region36
        $region35: #{tpu_custom_call.1} parent=31 // pred_region
          %236 = dma.done %s229, 6400
        $region36: #{tpu_custom_call.1} parent=31 // pred_fallthru
          _
        %s237 = sand.u32 %s23, 1
        %s238 = scalar_lea.sflag [#allocation7], %s237
        %s239 = sand.u32 %s77, 1
        %s240 = smul.addr %s239, 8
        %s241 = scalar_lea.vmem [#allocation6], %s240
        // Predicated region
        $region37: #{tpu_custom_call.1} parent=31 // pred_check
          %p242 = pneg %p90
        $region38: #{tpu_custom_call.1} parent=31 // pred_check_branch
          %244 = sbr.rel (%p242) target = $region40
        $region39: #{tpu_custom_call.1} parent=31 // pred_region
          %245 = dma.done %s238, 128
        $region40: #{tpu_custom_call.1} parent=31 // pred_fallthru
          _
        // Predicated region
        $region41: #{tpu_custom_call.1} parent=31 // pred_check
          %p246 = pneg %p111
        $region42: #{tpu_custom_call.1} parent=31 // pred_check_branch
          %248 = sbr.rel (%p246) target = $region44
        $region43: #{tpu_custom_call.1} parent=31 // pred_region
          %249 = dma.done [#allocation7], 28800
        $region44: #{tpu_custom_call.1} parent=31 // pred_fallthru
          _
        %s250 = sand.u32 %s49, 1
        %s251 = scalar_lea.sflag [#allocation4], %s250
        %s252 = sand.u32 %s49, 1
        %s253 = smul.addr %s252, 400
        %s254 = scalar_lea.vmem [#allocation3], %s253
        %p255 = pneg %p62
        %p256 = pneg %p59
        %s257 = sand.u32 %s23, 1
        %s258 = scalar_lea.sflag [#allocation7], %s257
        %s259 = sand.u32 %s77, 1
        %s260 = smul.addr %s259, 8
        %s261 = scalar_lea.vmem [#allocation6], %s260
        %p262 = pneg %p90
        %p263 = pneg %p87
        %p264 = pneg %p111
        %p265 = pneg %p108
        %p266 = pneg %p137
        %p267 = pneg %p134
        %s268 = sand.u32 %s124, 1
        %s269 = scalar_lea.sflag [#allocation5], %s268
        %s270 = sand.u32 %s124, 1
        %s271 = smul.addr %s270, 8
        %s272 = scalar_lea.vmem [#allocation9], %s271
        %s273 = sadd.s32 %s27, %s28
        %p274 = scmp.lt.s32.totalorder %s273, 0
        %s275 = scalar_select %p274, %s273, 0
        %s276 = smul.u32 8, %s275
        %s277 = ssub.s32 1, %s276
        %s278 = smul.u32 32, %s277
        %s279 = smul.u32 %s278, 25
        %s280 = sadd.s32 %s27, %s28
        %s281 = smul.u32 2, %s280
        %p282 = scmp.eq.s32.totalorder %s28, 0
        // Predicated region
        $region45: #{tpu_custom_call.1} parent=31 // pred_check
          %p283 = pneg %p282
        $region46: #{tpu_custom_call.1} parent=31 // pred_check_branch
          %285 = sbr.rel (%p283) target = $region48
        $region47: #{tpu_custom_call.1} parent=31 // pred_region
          %286 = vst [vmem:[#allocation2] sm:$0xff] 0.0
          %287 = vst [vmem:[#allocation2 + $0x8] sm:$0xff] 0.0
          %288 = vst [vmem:[#allocation2 + $0x10] sm:$0xff] 0.0
          %v289 = vlaneseq
          %vm290 = vcmp.ge.s32.totalorder %v289, 0
          %vm291 = vcmp.lt.s32.totalorder %v289, 128
          %vm292 = vmand %vm290, %vm291
          %293 = vst.msk [vmem:[#allocation2 + $0x18] sm:$0x1] %vm292, 0.0
        $region48: #{tpu_custom_call.1} parent=31 // pred_fallthru
          _
        %v294 = vld [vmem:[%s241] sm:$0xf]
        %v295 = vld [vmem:[%s241 + $0x4] sm:$0xf]
        %v296 = vunpack.c.l.b16 %v294
        %v297 = vunpack.c.l.b16 %v295
        %v298 = vcvt.s32.f32 %v296
        %v299 = vcvt.s32.f32 %v297
        %v300 = vld [vmem:[#allocation8] sm:$0xff]
        %v301 = vld [vmem:[#allocation8 + $0x8] sm:$0xff]
        %v302 = vld [vmem:[#allocation8 + $0x10] sm:$0xff]
        %v303 = vld [vmem:[#allocation8 + $0x18] sm:$0xff]
        %v304 = vld [vmem:[#allocation8 + $0x20] sm:$0xff]
        %v305 = vld [vmem:[#allocation8 + $0x28] sm:$0xff]
        %v306 = vld [vmem:[#allocation8 + $0x30] sm:$0xff]
        %v307 = vld [vmem:[#allocation8 + $0x38] sm:$0xff]
        %v308 = vld [vmem:[#allocation8 + $0x40] sm:$0xff]
        %v309 = vld [vmem:[#allocation8 + $0x48] sm:$0xff]
        %v310 = vld [vmem:[#allocation8 + $0x50] sm:$0xff]
        %v311 = vld [vmem:[#allocation8 + $0x58] sm:$0xff]
        %v312 = vld [vmem:[#allocation8 + $0x60] sm:$0xff]
        %v313 = vld [vmem:[#allocation8 + $0x68] sm:$0xff]
        %v314 = vld [vmem:[#allocation8 + $0x70] sm:$0xff]
        %v315 = vld [vmem:[#allocation8 + $0x78] sm:$0xff]
        %v316 = vld [vmem:[#allocation8 + $0x80] sm:$0xff]
        %v317 = vld [vmem:[#allocation8 + $0x88] sm:$0xff]
        %v318 = vld [vmem:[#allocation8 + $0x90] sm:$0xff]
        %v319 = vld [vmem:[#allocation8 + $0x98] sm:$0xff]
        %v320 = vld [vmem:[#allocation8 + $0xa0] sm:$0xff]
        %v321 = vld [vmem:[#allocation8 + $0xa8] sm:$0xff]
        %v322 = vld [vmem:[#allocation8 + $0xb0] sm:$0xff]
        %v323 = vld [vmem:[#allocation8 + $0xb8] sm:$0xff]
        %v324 = vld [vmem:[#allocation8 + $0xc0] sm:$0xff]
        %v325 = vld [vmem:[#allocation8 + $0xc8] sm:$0xff]
        %v326 = vld [vmem:[#allocation8 + $0xd0] sm:$0xff]
        %v327 = vld [vmem:[#allocation8 + $0xd8] sm:$0xff]
        %v328 = vld [vmem:[#allocation8 + $0xe0] sm:$0xff]
        %v329 = vld [vmem:[#allocation8 + $0xe8] sm:$0xff]
        %v330 = vld [vmem:[#allocation8 + $0xf0] sm:$0xff]
        %v331 = vld [vmem:[#allocation8 + $0xf8] sm:$0xff]
        %v332 = vld [vmem:[#allocation8 + $0x100] sm:$0xff]
        %v333 = vld [vmem:[#allocation8 + $0x108] sm:$0xff]
        %v334 = vld [vmem:[#allocation8 + $0x110] sm:$0xff]
        %v335 = vld [vmem:[#allocation8 + $0x118] sm:$0xff]
        %v336 = vld [vmem:[#allocation8 + $0x120] sm:$0xff]
        %v337 = vld [vmem:[#allocation8 + $0x128] sm:$0xff]
        %v338 = vld [vmem:[#allocation8 + $0x130] sm:$0xff]
        %v339 = vld [vmem:[#allocation8 + $0x138] sm:$0xff]
        %v340 = vld [vmem:[#allocation8 + $0x140] sm:$0xff]
        %v341 = vld [vmem:[#allocation8 + $0x148] sm:$0xff]
        %v342 = vld [vmem:[#allocation8 + $0x150] sm:$0xff]
        %v343 = vld [vmem:[#allocation8 + $0x158] sm:$0xff]
        %v344 = vld [vmem:[#allocation8 + $0x160] sm:$0xff]
        %v345 = vld [vmem:[#allocation8 + $0x168] sm:$0xff]
        %v346 = vld [vmem:[#allocation8 + $0x170] sm:$0xff]
        %v347 = vld [vmem:[#allocation8 + $0x178] sm:$0xff]
        %v348 = vld [vmem:[#allocation8 + $0x180] sm:$0xff]
        %v349 = vld [vmem:[#allocation8 + $0x188] sm:$0xff]
        %v350 = vld [vmem:[#allocation8 + $0x190] sm:$0xff]
        %v351 = vld [vmem:[#allocation8 + $0x198] sm:$0xff]
        %v352 = vld [vmem:[#allocation8 + $0x1a0] sm:$0xff]
        %v353 = vld [vmem:[#allocation8 + $0x1a8] sm:$0xff]
        %v354 = vld [vmem:[#allocation8 + $0x1b0] sm:$0xff]
        %v355 = vld [vmem:[#allocation8 + $0x1b8] sm:$0xff]
        %v356 = vld [vmem:[#allocation8 + $0x1c0] sm:$0xff]
        %v357 = vld [vmem:[#allocation8 + $0x1c8] sm:$0xff]
        %v358 = vld [vmem:[#allocation8 + $0x1d0] sm:$0xff]
        %v359 = vld [vmem:[#allocation8 + $0x1d8] sm:$0xff]
        %v360 = vld [vmem:[#allocation8 + $0x1e0] sm:$0xff]
        %v361 = vld [vmem:[#allocation8 + $0x1e8] sm:$0xff]
        %v362 = vld [vmem:[#allocation8 + $0x1f0] sm:$0xff]
        %v363 = vld [vmem:[#allocation8 + $0x1f8] sm:$0xff]
        %v364 = vld [vmem:[#allocation8 + $0x200] sm:$0xff]
        %v365 = vld [vmem:[#allocation8 + $0x208] sm:$0xff]
        %v366 = vld [vmem:[#allocation8 + $0x210] sm:$0xff]
        %v367 = vld [vmem:[#allocation8 + $0x218] sm:$0xff]
        %v368 = vld [vmem:[#allocation8 + $0x220] sm:$0xff]
        %v369 = vld [vmem:[#allocation8 + $0x228] sm:$0xff]
        %v370 = vld [vmem:[#allocation8 + $0x230] sm:$0xff]
        %v371 = vld [vmem:[#allocation8 + $0x238] sm:$0xff]
        %v372 = vld [vmem:[#allocation8 + $0x240] sm:$0xff]
        %v373 = vld [vmem:[#allocation8 + $0x248] sm:$0xff]
        %v374 = vld [vmem:[#allocation8 + $0x250] sm:$0xff]
        %v375 = vld [vmem:[#allocation8 + $0x258] sm:$0xff]
        %v376 = vld [vmem:[#allocation8 + $0x260] sm:$0xff]
        %v377 = vld [vmem:[#allocation8 + $0x268] sm:$0xff]
        %v378 = vld [vmem:[#allocation8 + $0x270] sm:$0xff]
        %v379 = vld [vmem:[#allocation8 + $0x278] sm:$0xff]
        %v380 = vld [vmem:[#allocation8 + $0x280] sm:$0xff]
        %v381 = vld [vmem:[#allocation8 + $0x288] sm:$0xff]
        %v382 = vld [vmem:[#allocation8 + $0x290] sm:$0xff]
        %v383 = vld [vmem:[#allocation8 + $0x298] sm:$0xff]
        %v384 = vld [vmem:[#allocation8 + $0x2a0] sm:$0xff]
        %v385 = vld [vmem:[#allocation8 + $0x2a8] sm:$0xff]
        %v386 = vld [vmem:[#allocation8 + $0x2b0] sm:$0xff]
        %v387 = vld [vmem:[#allocation8 + $0x2b8] sm:$0xff]
        %v388 = vld [vmem:[#allocation8 + $0x2c0] sm:$0xff]
        %v389 = vld [vmem:[#allocation8 + $0x2c8] sm:$0xff]
        %v390 = vld [vmem:[#allocation8 + $0x2d0] sm:$0xff]
        %v391 = vld [vmem:[#allocation8 + $0x2d8] sm:$0xff]
        %v392 = vld [vmem:[#allocation8 + $0x2e0] sm:$0xff]
        %v393 = vld [vmem:[#allocation8 + $0x2e8] sm:$0xff]
        %v394 = vld [vmem:[#allocation8 + $0x2f0] sm:$0xff]
        %v395 = vld [vmem:[#allocation8 + $0x2f8] sm:$0xff]
        %v396 = vld [vmem:[#allocation8 + $0x300] sm:$0xff]
        %v397 = vld [vmem:[#allocation8 + $0x308] sm:$0xff]
        %v398 = vld [vmem:[#allocation8 + $0x310] sm:$0xff]
        %v399 = vld [vmem:[#allocation8 + $0x318] sm:$0xff]
        %v400 = vld [vmem:[#allocation8 + $0x320] sm:$0xff]
        %v401 = vld [vmem:[#allocation8 + $0x328] sm:$0xff]
        %v402 = vld [vmem:[#allocation8 + $0x330] sm:$0xff]
        %v403 = vld [vmem:[#allocation8 + $0x338] sm:$0xff]
        %v404 = vld [vmem:[#allocation8 + $0x340] sm:$0xff]
        %v405 = vld [vmem:[#allocation8 + $0x348] sm:$0xff]
        %v406 = vld [vmem:[#allocation8 + $0x350] sm:$0xff]
        %v407 = vld [vmem:[#allocation8 + $0x358] sm:$0xff]
        %v408 = vld [vmem:[#allocation8 + $0x360] sm:$0xff]
        %v409 = vld [vmem:[#allocation8 + $0x368] sm:$0xff]
        %v410 = vld [vmem:[#allocation8 + $0x370] sm:$0xff]
        %v411 = vld [vmem:[#allocation8 + $0x378] sm:$0xff]
        %v412 = vld [vmem:[#allocation8 + $0x380] sm:$0xff]
        %v413 = vld [vmem:[#allocation8 + $0x388] sm:$0xff]
        %v414 = vld [vmem:[#allocation8 + $0x390] sm:$0xff]
        %v415 = vld [vmem:[#allocation8 + $0x398] sm:$0xff]
        %v416 = vld [vmem:[#allocation8 + $0x3a0] sm:$0xff]
        %v417 = vld [vmem:[#allocation8 + $0x3a8] sm:$0xff]
        %v418 = vld [vmem:[#allocation8 + $0x3b0] sm:$0xff]
        %v419 = vld [vmem:[#allocation8 + $0x3b8] sm:$0xff]
        %v420 = vld [vmem:[#allocation8 + $0x3c0] sm:$0xff]
        %v421 = vld [vmem:[#allocation8 + $0x3c8] sm:$0xff]
        %v422 = vld [vmem:[#allocation8 + $0x3d0] sm:$0xff]
        %v423 = vld [vmem:[#allocation8 + $0x3d8] sm:$0xff]
        %v424 = vld [vmem:[#allocation8 + $0x3e0] sm:$0xff]
        %v425 = vld [vmem:[#allocation8 + $0x3e8] sm:$0xff]
        %v426 = vld [vmem:[#allocation8 + $0x3f0] sm:$0xff]
        %v427 = vld [vmem:[#allocation8 + $0x3f8] sm:$0xff]
        %v428 = vld [vmem:[#allocation8 + $0x400] sm:$0xff]
        %v429 = vld [vmem:[#allocation8 + $0x408] sm:$0xff]
        %v430 = vld [vmem:[#allocation8 + $0x410] sm:$0xff]
        %v431 = vld [vmem:[#allocation8 + $0x418] sm:$0xff]
        %v432 = vld [vmem:[#allocation8 + $0x420] sm:$0xff]
        %v433 = vld [vmem:[#allocation8 + $0x428] sm:$0xff]
        %v434 = vld [vmem:[#allocation8 + $0x430] sm:$0xff]
        %v435 = vld [vmem:[#allocation8 + $0x438] sm:$0xff]
        %v436 = vld [vmem:[#allocation8 + $0x440] sm:$0xff]
        %v437 = vld [vmem:[#allocation8 + $0x448] sm:$0xff]
        %v438 = vld [vmem:[#allocation8 + $0x450] sm:$0xff]
        %v439 = vld [vmem:[#allocation8 + $0x458] sm:$0xff]
        %v440 = vld [vmem:[#allocation8 + $0x460] sm:$0xff]
        %v441 = vld [vmem:[#allocation8 + $0x468] sm:$0xff]
        %v442 = vld [vmem:[#allocation8 + $0x470] sm:$0xff]
        %v443 = vld [vmem:[#allocation8 + $0x478] sm:$0xff]
        %v444 = vld [vmem:[#allocation8 + $0x480] sm:$0xff]
        %v445 = vld [vmem:[#allocation8 + $0x488] sm:$0xff]
        %v446 = vld [vmem:[#allocation8 + $0x490] sm:$0xff]
        %v447 = vld [vmem:[#allocation8 + $0x498] sm:$0xff]
        %v448 = vld [vmem:[#allocation8 + $0x4a0] sm:$0xff]
        %v449 = vld [vmem:[#allocation8 + $0x4a8] sm:$0xff]
        %v450 = vld [vmem:[#allocation8 + $0x4b0] sm:$0xff]
        %v451 = vld [vmem:[#allocation8 + $0x4b8] sm:$0xff]
        %v452 = vld [vmem:[#allocation8 + $0x4c0] sm:$0xff]
        %v453 = vld [vmem:[#allocation8 + $0x4c8] sm:$0xff]
        %v454 = vld [vmem:[#allocation8 + $0x4d0] sm:$0xff]
        %v455 = vld [vmem:[#allocation8 + $0x4d8] sm:$0xff]
        %v456 = vld [vmem:[#allocation8 + $0x4e0] sm:$0xff]
        %v457 = vld [vmem:[#allocation8 + $0x4e8] sm:$0xff]
        %v458 = vld [vmem:[#allocation8 + $0x4f0] sm:$0xff]
        %v459 = vld [vmem:[#allocation8 + $0x4f8] sm:$0xff]
        %v460 = vld [vmem:[#allocation8 + $0x500] sm:$0xff]
        %v461 = vld [vmem:[#allocation8 + $0x508] sm:$0xff]
        %v462 = vld [vmem:[#allocation8 + $0x510] sm:$0xff]
        %v463 = vld [vmem:[#allocation8 + $0x518] sm:$0xff]
        %v464 = vld [vmem:[#allocation8 + $0x520] sm:$0xff]
        %v465 = vld [vmem:[#allocation8 + $0x528] sm:$0xff]
        %v466 = vld [vmem:[#allocation8 + $0x530] sm:$0xff]
        %v467 = vld [vmem:[#allocation8 + $0x538] sm:$0xff]
        %v468 = vld [vmem:[#allocation8 + $0x540] sm:$0xff]
        %v469 = vld [vmem:[#allocation8 + $0x548] sm:$0xff]
        %v470 = vld [vmem:[#allocation8 + $0x550] sm:$0xff]
        %v471 = vld [vmem:[#allocation8 + $0x558] sm:$0xff]
        %v472 = vld [vmem:[#allocation8 + $0x560] sm:$0xff]
        %v473 = vld [vmem:[#allocation8 + $0x568] sm:$0xff]
        %v474 = vld [vmem:[#allocation8 + $0x570] sm:$0xff]
        %v475 = vld [vmem:[#allocation8 + $0x578] sm:$0xff]
        %v476 = vld [vmem:[#allocation8 + $0x580] sm:$0xff]
        %v477 = vld [vmem:[#allocation8 + $0x588] sm:$0xff]
        %v478 = vld [vmem:[#allocation8 + $0x590] sm:$0xff]
        %v479 = vld [vmem:[#allocation8 + $0x598] sm:$0xff]
        %v480 = vld [vmem:[#allocation8 + $0x5a0] sm:$0xff]
        %v481 = vld [vmem:[#allocation8 + $0x5a8] sm:$0xff]
        %v482 = vld [vmem:[#allocation8 + $0x5b0] sm:$0xff]
        %v483 = vld [vmem:[#allocation8 + $0x5b8] sm:$0xff]
        %v484 = vld [vmem:[#allocation8 + $0x5c0] sm:$0xff]
        %v485 = vld [vmem:[#allocation8 + $0x5c8] sm:$0xff]
        %v486 = vld [vmem:[#allocation8 + $0x5d0] sm:$0xff]
        %v487 = vld [vmem:[#allocation8 + $0x5d8] sm:$0xff]
        %v488 = vld [vmem:[#allocation8 + $0x5e0] sm:$0xff]
        %v489 = vld [vmem:[#allocation8 + $0x5e8] sm:$0xff]
        %v490 = vld [vmem:[#allocation8 + $0x5f0] sm:$0xff]
        %v491 = vld [vmem:[#allocation8 + $0x5f8] sm:$0xff]
        %v492 = vld [vmem:[#allocation8 + $0x600] sm:$0xff]
        %v493 = vld [vmem:[#allocation8 + $0x608] sm:$0xff]
        %v494 = vld [vmem:[#allocation8 + $0x610] sm:$0xff]
        %v495 = vld [vmem:[#allocation8 + $0x618] sm:$0xff]
        %v496 = vld [vmem:[#allocation8 + $0x620] sm:$0xff]
        %v497 = vld [vmem:[#allocation8 + $0x628] sm:$0xff]
        %v498 = vld [vmem:[#allocation8 + $0x630] sm:$0xff]
        %v499 = vld [vmem:[#allocation8 + $0x638] sm:$0xff]
        %v500 = vld [vmem:[#allocation8 + $0x640] sm:$0x1]
        %v501 = vld [vmem:[#allocation8 + $0x648] sm:$0x1]
        %v502 = vld [vmem:[#allocation8 + $0x650] sm:$0x1]
        %v503 = vld [vmem:[#allocation8 + $0x658] sm:$0x1]
        %v504 = vld [vmem:[#allocation8 + $0x660] sm:$0x1]
        %v505 = vld [vmem:[#allocation8 + $0x668] sm:$0x1]
        %v506 = vld [vmem:[#allocation8 + $0x670] sm:$0x1]
        %v507 = vld [vmem:[#allocation8 + $0x678] sm:$0x1]
        %v508 = vld [vmem:[#allocation8 + $0x680] sm:$0x1]
        %v509 = vld [vmem:[#allocation8 + $0x688] sm:$0x1]
        %v510 = vld [vmem:[#allocation8 + $0x690] sm:$0x1]
        %v511 = vld [vmem:[#allocation8 + $0x698] sm:$0x1]
        %v512 = vld [vmem:[#allocation8 + $0x6a0] sm:$0x1]
        %v513 = vld [vmem:[#allocation8 + $0x6a8] sm:$0x1]
        %v514 = vld [vmem:[#allocation8 + $0x6b0] sm:$0x1]
        %v515 = vld [vmem:[#allocation8 + $0x6b8] sm:$0x1]
        %v516 = vld [vmem:[#allocation8 + $0x6c0] sm:$0x1]
        %v517 = vld [vmem:[#allocation8 + $0x6c8] sm:$0x1]
        %v518 = vld [vmem:[#allocation8 + $0x6d0] sm:$0x1]
        %v519 = vld [vmem:[#allocation8 + $0x6d8] sm:$0x1]
        %v520 = vld [vmem:[#allocation8 + $0x6e0] sm:$0x1]
        %v521 = vld [vmem:[#allocation8 + $0x6e8] sm:$0x1]
        %v522 = vld [vmem:[#allocation8 + $0x6f0] sm:$0x1]
        %v523 = vld [vmem:[#allocation8 + $0x6f8] sm:$0x1]
        %v524 = vld [vmem:[#allocation8 + $0x700] sm:$0x1]
        %vm525 = vcmask 531456
        %v527 = vsel %vm525, %v298, 0
        %v530 = vsel %vm525, %v299, 0
        %vm532 = vcmask 1040384
        %v534 = vsel %vm532, %v500, 0
        %v537 = vsel %vm532, %v501, 0
        %v540 = vsel %vm532, %v502, 0
        %v543 = vsel %vm532, %v503, 0
        %v546 = vsel %vm532, %v504, 0
        %v549 = vsel %vm532, %v505, 0
        %v552 = vsel %vm532, %v506, 0
        %v555 = vsel %vm532, %v507, 0
        %v558 = vsel %vm532, %v508, 0
        %v561 = vsel %vm532, %v509, 0
        %v564 = vsel %vm532, %v510, 0
        %v567 = vsel %vm532, %v511, 0
        %v570 = vsel %vm532, %v512, 0
        %v573 = vsel %vm532, %v513, 0
        %v576 = vsel %vm532, %v514, 0
        %v579 = vsel %vm532, %v515, 0
        %v582 = vsel %vm532, %v516, 0
        %v585 = vsel %vm532, %v517, 0
        %v588 = vsel %vm532, %v518, 0
        %v591 = vsel %vm532, %v519, 0
        %v594 = vsel %vm532, %v520, 0
        %v597 = vsel %vm532, %v521, 0
        %v600 = vsel %vm532, %v522, 0
        %v603 = vsel %vm532, %v523, 0
        %v606 = vsel %vm532, %v524, 0
        %608 = vmatprep.subr.mxu0 %v301
        %609 = vmatpush1.msra.mxu0 %v300
        %610 = vmatprep.subr.mxu0 %v326
        %611 = vmatpush1.msra.mxu0 %v325
        %612 = vmatprep.subr.mxu0 %v351
        %613 = vmatpush1.msra.mxu0 %v350
        %614 = vmatprep.subr.mxu0 %v376
        %615 = vmatpush1.msra.mxu0 %v375
        %616 = vmatprep.subr.mxu0 %v401
        %617 = vmatpush1.msra.mxu0 %v400
        %618 = vmatprep.subr.mxu0 %v426
        %619 = vmatpush1.msra.mxu0 %v425
        %620 = vmatprep.subr.mxu0 %v451
        %621 = vmatpush1.msra.mxu0 %v450
        %622 = vmatprep.subr.mxu0 %v476
        %623 = vmatpush1.msra.mxu0 %v475
        %624 = vmatprep.subr.mxu0 %v537
        %625 = vmatpush1.msra.mxu0 %v534
        %626 = vmatprep.subr.mxu0 0.0
        %627 = vmatpush1.msra.mxu0 0.0
        %628 = vmatprep.subr.mxu0 0.0
        %629 = vmatpush1.msra.mxu0 0.0
        %630 = vmatprep.subr.mxu0 0.0
        %631 = vmatpush1.msra.mxu0 0.0
        %632 = vmatprep.subr.mxu0 0.0
        %633 = vmatpush1.msra.mxu0 0.0
        %634 = vmatprep.subr.mxu0 0.0
        %635 = vmatpush1.msra.mxu0 0.0
        %636 = vmatprep.subr.mxu0 0.0
        %637 = vmatpush1.msra.mxu0 0.0
        %638 = vmatprep.subr.mxu0 0.0
        %639 = vmatpush1.msra.mxu0 0.0
        %640 = vmatprep.subr.mxu0 0.0
        %641 = vmatpush1.msra.mxu0 0.0
        %642 = vmatprep.subr.mxu0 0.0
        %643 = vmatpush1.msra.mxu0 0.0
        %644 = vmatprep.subr.mxu0 0.0
        %645 = vmatpush1.msra.mxu0 0.0
        %646 = vmatprep.subr.mxu0 0.0
        %647 = vmatpush1.msra.mxu0 0.0
        %648 = vmatprep.subr.mxu0 0.0
        %649 = vmatpush1.msra.mxu0 0.0
        %650 = vmatprep.subr.mxu0 0.0
        %651 = vmatpush1.msra.mxu0 0.0
        %652 = vmatprep.subr.mxu0 0.0
        %653 = vmatpush1.msra.mxu0 0.0
        %654 = vmatprep.subr.mxu0 0.0
        %655 = vmatpush1.msra.mxu0 0.0
        %656 = vmatprep.subr.mxu0 0.0
        %657 = vmatpush1.msra.mxu0 0.0
        %658 = vmatprep.subr.mxu0 0.0
        %659 = vmatpush1.msra.mxu0 0.0
        %660 = vmatprep.subr.mxu0 0.0
        %661 = vmatpush1.msra.mxu0 0.0
        %662 = vmatprep.subr.mxu0 0.0
        %663 = vmatpush1.msra.mxu0 0.0
        %664 = vmatprep.subr.mxu0 0.0
        %665 = vmatpush1.msra.mxu0 0.0
        %666 = vmatprep.subr.mxu0 0.0
        %667 = vmatpush1.msra.mxu0 0.0
        %668 = vmatprep.subr.mxu0 0.0
        %669 = vmatpush1.msra.mxu0 0.0
        %670 = vmatprep.subr.mxu0 0.0
        %671 = vmatpush1.msra.mxu0 0.0
        %672 = vmatprep.mubr.f32.mxu0 0.0
        %673 = vmatmul.mubr.f32.gmra.mrb[0].mxu0 %v527
        %v674 = vpop.f32.mrb[0].mxu0
        %v675 = vadd.f32 0.0, %v674
        %v676 = vpop.f32.mrb[0].mxu0
        %v677 = vadd.f32 0.0, %v676
        %678 = vmatprep.mubr.f32.mxu0 0.0
        %679 = vmatmul.mubr.f32.gmra.mrb[0].mxu0 %v530
        %v680 = vpop.f32.mrb[0].mxu0
        %v681 = vadd.f32 0.0, %v680
        %v682 = vpop.f32.mrb[0].mxu0
        %v683 = vadd.f32 0.0, %v682
        %684 = vdwg.mxu0
        %685 = vmatprep.subr.mxu0 %v303
        %686 = vmatpush1.msra.mxu0 %v302
        %687 = vmatprep.subr.mxu0 %v328
        %688 = vmatpush1.msra.mxu0 %v327
        %689 = vmatprep.subr.mxu0 %v353
        %690 = vmatpush1.msra.mxu0 %v352
        %691 = vmatprep.subr.mxu0 %v378
        %692 = vmatpush1.msra.mxu0 %v377
        %693 = vmatprep.subr.mxu0 %v403
        %694 = vmatpush1.msra.mxu0 %v402
        %695 = vmatprep.subr.mxu0 %v428
        %696 = vmatpush1.msra.mxu0 %v427
        %697 = vmatprep.subr.mxu0 %v453
        %698 = vmatpush1.msra.mxu0 %v452
        %699 = vmatprep.subr.mxu0 %v478
        %700 = vmatpush1.msra.mxu0 %v477
        %701 = vmatprep.subr.mxu0 %v543
        %702 = vmatpush1.msra.mxu0 %v540
        %703 = vmatprep.subr.mxu0 0.0
        %704 = vmatpush1.msra.mxu0 0.0
        %705 = vmatprep.subr.mxu0 0.0
        %706 = vmatpush1.msra.mxu0 0.0
        %707 = vmatprep.subr.mxu0 0.0
        %708 = vmatpush1.msra.mxu0 0.0
        %709 = vmatprep.subr.mxu0 0.0
        %710 = vmatpush1.msra.mxu0 0.0
        %711 = vmatprep.subr.mxu0 0.0
        %712 = vmatpush1.msra.mxu0 0.0
        %713 = vmatprep.subr.mxu0 0.0
        %714 = vmatpush1.msra.mxu0 0.0
        %715 = vmatprep.subr.mxu0 0.0
        %716 = vmatpush1.msra.mxu0 0.0
        %717 = vmatprep.subr.mxu0 0.0
        %718 = vmatpush1.msra.mxu0 0.0
        %719 = vmatprep.subr.mxu0 0.0
        %720 = vmatpush1.msra.mxu0 0.0
        %721 = vmatprep.subr.mxu0 0.0
        %722 = vmatpush1.msra.mxu0 0.0
        %723 = vmatprep.subr.mxu0 0.0
        %724 = vmatpush1.msra.mxu0 0.0
        %725 = vmatprep.subr.mxu0 0.0
        %726 = vmatpush1.msra.mxu0 0.0
        %727 = vmatprep.subr.mxu0 0.0
        %728 = vmatpush1.msra.mxu0 0.0
        %729 = vmatprep.subr.mxu0 0.0
        %730 = vmatpush1.msra.mxu0 0.0
        %731 = vmatprep.subr.mxu0 0.0
        %732 = vmatpush1.msra.mxu0 0.0
        %733 = vmatprep.subr.mxu0 0.0
        %734 = vmatpush1.msra.mxu0 0.0
        %735 = vmatprep.subr.mxu0 0.0
        %736 = vmatpush1.msra.mxu0 0.0
        %737 = vmatprep.subr.mxu0 0.0
        %738 = vmatpush1.msra.mxu0 0.0
        %739 = vmatprep.subr.mxu0 0.0
        %740 = vmatpush1.msra.mxu0 0.0
        %741 = vmatprep.subr.mxu0 0.0
        %742 = vmatpush1.msra.mxu0 0.0
        %743 = vmatprep.subr.mxu0 0.0
        %744 = vmatpush1.msra.mxu0 0.0
        %745 = vmatprep.subr.mxu0 0.0
        %746 = vmatpush1.msra.mxu0 0.0
        %747 = vmatprep.subr.mxu0 0.0
        %748 = vmatpush1.msra.mxu0 0.0
        %749 = vmatprep.mubr.f32.mxu0 0.0
        %750 = vmatmul.mubr.f32.gmra.mrb[0].mxu0 %v527
        %v751 = vpop.f32.mrb[0].mxu0
        %v752 = vadd.f32 0.0, %v751
        %v753 = vpop.f32.mrb[0].mxu0
        %v754 = vadd.f32 0.0, %v753
        %755 = vmatprep.mubr.f32.mxu0 0.0
        %756 = vmatmul.mubr.f32.gmra.mrb[0].mxu0 %v530
        %v757 = vpop.f32.mrb[0].mxu0
        %v758 = vadd.f32 0.0, %v757
        %v759 = vpop.f32.mrb[0].mxu0
        %v760 = vadd.f32 0.0, %v759
        %761 = vdwg.mxu0
        %762 = vmatprep.subr.mxu0 %v305
        %763 = vmatpush1.msra.mxu0 %v304
        %764 = vmatprep.subr.mxu0 %v330
        %765 = vmatpush1.msra.mxu0 %v329
        %766 = vmatprep.subr.mxu0 %v355
        %767 = vmatpush1.msra.mxu0 %v354
        %768 = vmatprep.subr.mxu0 %v380
        %769 = vmatpush1.msra.mxu0 %v379
        %770 = vmatprep.subr.mxu0 %v405
        %771 = vmatpush1.msra.mxu0 %v404
        %772 = vmatprep.subr.mxu0 %v430
        %773 = vmatpush1.msra.mxu0 %v429
        %774 = vmatprep.subr.mxu0 %v455
        %775 = vmatpush1.msra.mxu0 %v454
        %776 = vmatprep.subr.mxu0 %v480
        %777 = vmatpush1.msra.mxu0 %v479
        %778 = vmatprep.subr.mxu0 %v549
        %779 = vmatpush1.msra.mxu0 %v546
        %780 = vmatprep.subr.mxu0 0.0
        %781 = vmatpush1.msra.mxu0 0.0
        %782 = vmatprep.subr.mxu0 0.0
        %783 = vmatpush1.msra.mxu0 0.0
        %784 = vmatprep.subr.mxu0 0.0
        %785 = vmatpush1.msra.mxu0 0.0
        %786 = vmatprep.subr.mxu0 0.0
        %787 = vmatpush1.msra.mxu0 0.0
        %788 = vmatprep.subr.mxu0 0.0
        %789 = vmatpush1.msra.mxu0 0.0
        %790 = vmatprep.subr.mxu0 0.0
        %791 = vmatpush1.msra.mxu0 0.0
        %792 = vmatprep.subr.mxu0 0.0
        %793 = vmatpush1.msra.mxu0 0.0
        %794 = vmatprep.subr.mxu0 0.0
        %795 = vmatpush1.msra.mxu0 0.0
        %796 = vmatprep.subr.mxu0 0.0
        %797 = vmatpush1.msra.mxu0 0.0
        %798 = vmatprep.subr.mxu0 0.0
        %799 = vmatpush1.msra.mxu0 0.0
        %800 = vmatprep.subr.mxu0 0.0
        %801 = vmatpush1.msra.mxu0 0.0
        %802 = vmatprep.subr.mxu0 0.0
        %803 = vmatpush1.msra.mxu0 0.0
        %804 = vmatprep.subr.mxu0 0.0
        %805 = vmatpush1.msra.mxu0 0.0
        %806 = vmatprep.subr.mxu0 0.0
        %807 = vmatpush1.msra.mxu0 0.0
        %808 = vmatprep.subr.mxu0 0.0
        %809 = vmatpush1.msra.mxu0 0.0
        %810 = vmatprep.subr.mxu0 0.0
        %811 = vmatpush1.msra.mxu0 0.0
        %812 = vmatprep.subr.mxu0 0.0
        %813 = vmatpush1.msra.mxu0 0.0
        %814 = vmatprep.subr.mxu0 0.0
        %815 = vmatpush1.msra.mxu0 0.0
        %816 = vmatprep.subr.mxu0 0.0
        %817 = vmatpush1.msra.mxu0 0.0
        %818 = vmatprep.subr.mxu0 0.0
        %819 = vmatpush1.msra.mxu0 0.0
        %820 = vmatprep.subr.mxu0 0.0
        %821 = vmatpush1.msra.mxu0 0.0
        %822 = vmatprep.subr.mxu0 0.0
        %823 = vmatpush1.msra.mxu0 0.0
        %824 = vmatprep.subr.mxu0 0.0
        %825 = vmatpush1.msra.mxu0 0.0
        %826 = vmatprep.mubr.f32.mxu0 0.0
        %827 = vmatmul.mubr.f32.gmra.mrb[0].mxu0 %v527
        %v828 = vpop.f32.mrb[0].mxu0
        %v829 = vadd.f32 0.0, %v828
        %v830 = vpop.f32.mrb[0].mxu0
        %v831 = vadd.f32 0.0, %v830
        %832 = vmatprep.mubr.f32.mxu0 0.0
        %833 = vmatmul.mubr.f32.gmra.mrb[0].mxu0 %v530
        %v834 = vpop.f32.mrb[0].mxu0
        %v835 = vadd.f32 0.0, %v834
        %v836 = vpop.f32.mrb[0].mxu0
        %v837 = vadd.f32 0.0, %v836
        %838 = vdwg.mxu0
        %839 = vmatprep.subr.mxu0 %v307
        %840 = vmatpush1.msra.mxu0 %v306
        %841 = vmatprep.subr.mxu0 %v332
        %842 = vmatpush1.msra.mxu0 %v331
        %843 = vmatprep.subr.mxu0 %v357
        %844 = vmatpush1.msra.mxu0 %v356
        %845 = vmatprep.subr.mxu0 %v382
        %846 = vmatpush1.msra.mxu0 %v381
        %847 = vmatprep.subr.mxu0 %v407
        %848 = vmatpush1.msra.mxu0 %v406
        %849 = vmatprep.subr.mxu0 %v432
        %850 = vmatpush1.msra.mxu0 %v431
        %851 = vmatprep.subr.mxu0 %v457
        %852 = vmatpush1.msra.mxu0 %v456
        %853 = vmatprep.subr.mxu0 %v482
        %854 = vmatpush1.msra.mxu0 %v481
        %855 = vmatprep.subr.mxu0 %v555
        %856 = vmatpush1.msra.mxu0 %v552
        %857 = vmatprep.subr.mxu0 0.0
        %858 = vmatpush1.msra.mxu0 0.0
        %859 = vmatprep.subr.mxu0 0.0
        %860 = vmatpush1.msra.mxu0 0.0
        %861 = vmatprep.subr.mxu0 0.0
        %862 = vmatpush1.msra.mxu0 0.0
        %863 = vmatprep.subr.mxu0 0.0
        %864 = vmatpush1.msra.mxu0 0.0
        %865 = vmatprep.subr.mxu0 0.0
        %866 = vmatpush1.msra.mxu0 0.0
        %867 = vmatprep.subr.mxu0 0.0
        %868 = vmatpush1.msra.mxu0 0.0
        %869 = vmatprep.subr.mxu0 0.0
        %870 = vmatpush1.msra.mxu0 0.0
        %871 = vmatprep.subr.mxu0 0.0
        %872 = vmatpush1.msra.mxu0 0.0
        %873 = vmatprep.subr.mxu0 0.0
        %874 = vmatpush1.msra.mxu0 0.0
        %875 = vmatprep.subr.mxu0 0.0
        %876 = vmatpush1.msra.mxu0 0.0
        %877 = vmatprep.subr.mxu0 0.0
        %878 = vmatpush1.msra.mxu0 0.0
        %879 = vmatprep.subr.mxu0 0.0
        %880 = vmatpush1.msra.mxu0 0.0
        %881 = vmatprep.subr.mxu0 0.0
        %882 = vmatpush1.msra.mxu0 0.0
        %883 = vmatprep.subr.mxu0 0.0
        %884 = vmatpush1.msra.mxu0 0.0
        %885 = vmatprep.subr.mxu0 0.0
        %886 = vmatpush1.msra.mxu0 0.0
        %887 = vmatprep.subr.mxu0 0.0
        %888 = vmatpush1.msra.mxu0 0.0
        %889 = vmatprep.subr.mxu0 0.0
        %890 = vmatpush1.msra.mxu0 0.0
        %891 = vmatprep.subr.mxu0 0.0
        %892 = vmatpush1.msra.mxu0 0.0
        %893 = vmatprep.subr.mxu0 0.0
        %894 = vmatpush1.msra.mxu0 0.0
        %895 = vmatprep.subr.mxu0 0.0
        %896 = vmatpush1.msra.mxu0 0.0
        %897 = vmatprep.subr.mxu0 0.0
        %898 = vmatpush1.msra.mxu0 0.0
        %899 = vmatprep.subr.mxu0 0.0
        %900 = vmatpush1.msra.mxu0 0.0
        %901 = vmatprep.subr.mxu0 0.0
        %902 = vmatpush1.msra.mxu0 0.0
        %903 = vmatprep.mubr.f32.mxu0 0.0
        %904 = vmatmul.mubr.f32.gmra.mrb[0].mxu0 %v527
        %v905 = vpop.f32.mrb[0].mxu0
        %v906 = vadd.f32 0.0, %v905
        %v907 = vpop.f32.mrb[0].mxu0
        %v908 = vadd.f32 0.0, %v907
        %909 = vmatprep.mubr.f32.mxu0 0.0
        %910 = vmatmul.mubr.f32.gmra.mrb[0].mxu0 %v530
        %v911 = vpop.f32.mrb[0].mxu0
        %v912 = vadd.f32 0.0, %v911
        %v913 = vpop.f32.mrb[0].mxu0
        %v914 = vadd.f32 0.0, %v913
        %915 = vdwg.mxu0
        %916 = vmatprep.subr.mxu0 %v309
        %917 = vmatpush1.msra.mxu0 %v308
        %918 = vmatprep.subr.mxu0 %v334
        %919 = vmatpush1.msra.mxu0 %v333
        %920 = vmatprep.subr.mxu0 %v359
        %921 = vmatpush1.msra.mxu0 %v358
        %922 = vmatprep.subr.mxu0 %v384
        %923 = vmatpush1.msra.mxu0 %v383
        %924 = vmatprep.subr.mxu0 %v409
        %925 = vmatpush1.msra.mxu0 %v408
        %926 = vmatprep.subr.mxu0 %v434
        %927 = vmatpush1.msra.mxu0 %v433
        %928 = vmatprep.subr.mxu0 %v459
        %929 = vmatpush1.msra.mxu0 %v458
        %930 = vmatprep.subr.mxu0 %v484
        %931 = vmatpush1.msra.mxu0 %v483
        %932 = vmatprep.subr.mxu0 %v561
        %933 = vmatpush1.msra.mxu0 %v558
        %934 = vmatprep.subr.mxu0 0.0
        %935 = vmatpush1.msra.mxu0 0.0
        %936 = vmatprep.subr.mxu0 0.0
        %937 = vmatpush1.msra.mxu0 0.0
        %938 = vmatprep.subr.mxu0 0.0
        %939 = vmatpush1.msra.mxu0 0.0
        %940 = vmatprep.subr.mxu0 0.0
        %941 = vmatpush1.msra.mxu0 0.0
        %942 = vmatprep.subr.mxu0 0.0
        %943 = vmatpush1.msra.mxu0 0.0
        %944 = vmatprep.subr.mxu0 0.0
        %945 = vmatpush1.msra.mxu0 0.0
        %946 = vmatprep.subr.mxu0 0.0
        %947 = vmatpush1.msra.mxu0 0.0
        %948 = vmatprep.subr.mxu0 0.0
        %949 = vmatpush1.msra.mxu0 0.0
        %950 = vmatprep.subr.mxu0 0.0
        %951 = vmatpush1.msra.mxu0 0.0
        %952 = vmatprep.subr.mxu0 0.0
        %953 = vmatpush1.msra.mxu0 0.0
        %954 = vmatprep.subr.mxu0 0.0
        %955 = vmatpush1.msra.mxu0 0.0
        %956 = vmatprep.subr.mxu0 0.0
        %957 = vmatpush1.msra.mxu0 0.0
        %958 = vmatprep.subr.mxu0 0.0
        %959 = vmatpush1.msra.mxu0 0.0
        %960 = vmatprep.subr.mxu0 0.0
        %961 = vmatpush1.msra.mxu0 0.0
        %962 = vmatprep.subr.mxu0 0.0
        %963 = vmatpush1.msra.mxu0 0.0
        %964 = vmatprep.subr.mxu0 0.0
        %965 = vmatpush1.msra.mxu0 0.0
        %966 = vmatprep.subr.mxu0 0.0
        %967 = vmatpush1.msra.mxu0 0.0
        %968 = vmatprep.subr.mxu0 0.0
        %969 = vmatpush1.msra.mxu0 0.0
        %970 = vmatprep.subr.mxu0 0.0
        %971 = vmatpush1.msra.mxu0 0.0
        %972 = vmatprep.subr.mxu0 0.0
        %973 = vmatpush1.msra.mxu0 0.0
        %974 = vmatprep.subr.mxu0 0.0
        %975 = vmatpush1.msra.mxu0 0.0
        %976 = vmatprep.subr.mxu0 0.0
        %977 = vmatpush1.msra.mxu0 0.0
        %978 = vmatprep.subr.mxu0 0.0
        %979 = vmatpush1.msra.mxu0 0.0
        %980 = vmatprep.mubr.f32.mxu0 0.0
        %981 = vmatmul.mubr.f32.gmra.mrb[0].mxu0 %v527
        %v982 = vpop.f32.mrb[0].mxu0
        %v983 = vadd.f32 0.0, %v982
        %v984 = vpop.f32.mrb[0].mxu0
        %v985 = vadd.f32 0.0, %v984
        %986 = vmatprep.mubr.f32.mxu0 0.0
        %987 = vmatmul.mubr.f32.gmra.mrb[0].mxu0 %v530
        %v988 = vpop.f32.mrb[0].mxu0
        %v989 = vadd.f32 0.0, %v988
        %v990 = vpop.f32.mrb[0].mxu0
        %v991 = vadd.f32 0.0, %v990
        %992 = vdwg.mxu0
        %993 = vmatprep.subr.mxu0 %v311
        %994 = vmatpush1.msra.mxu0 %v310
        %995 = vmatprep.subr.mxu0 %v336
        %996 = vmatpush1.msra.mxu0 %v335
        %997 = vmatprep.subr.mxu0 %v361
        %998 = vmatpush1.msra.mxu0 %v360
        %999 = vmatprep.subr.mxu0 %v386
        %1000 = vmatpush1.msra.mxu0 %v385
        %1001 = vmatprep.subr.mxu0 %v411
        %1002 = vmatpush1.msra.mxu0 %v410
        %1003 = vmatprep.subr.mxu0 %v436
        %1004 = vmatpush1.msra.mxu0 %v435
        %1005 = vmatprep.subr.mxu0 %v461
        %1006 = vmatpush1.msra.mxu0 %v460
        %1007 = vmatprep.subr.mxu0 %v486
        %1008 = vmatpush1.msra.mxu0 %v485
        %1009 = vmatprep.subr.mxu0 %v567
        %1010 = vmatpush1.msra.mxu0 %v564
        %1011 = vmatprep.subr.mxu0 0.0
        %1012 = vmatpush1.msra.mxu0 0.0
        %1013 = vmatprep.subr.mxu0 0.0
        %1014 = vmatpush1.msra.mxu0 0.0
        %1015 = vmatprep.subr.mxu0 0.0
        %1016 = vmatpush1.msra.mxu0 0.0
        %1017 = vmatprep.subr.mxu0 0.0
        %1018 = vmatpush1.msra.mxu0 0.0
        %1019 = vmatprep.subr.mxu0 0.0
        %1020 = vmatpush1.msra.mxu0 0.0
        %1021 = vmatprep.subr.mxu0 0.0
        %1022 = vmatpush1.msra.mxu0 0.0
        %1023 = vmatprep.subr.mxu0 0.0
        %1024 = vmatpush1.msra.mxu0 0.0
        %1025 = vmatprep.subr.mxu0 0.0
        %1026 = vmatpush1.msra.mxu0 0.0
        %1027 = vmatprep.subr.mxu0 0.0
        %1028 = vmatpush1.msra.mxu0 0.0
        %1029 = vmatprep.subr.mxu0 0.0
        %1030 = vmatpush1.msra.mxu0 0.0
        %1031 = vmatprep.subr.mxu0 0.0
        %1032 = vmatpush1.msra.mxu0 0.0
        %1033 = vmatprep.subr.mxu0 0.0
        %1034 = vmatpush1.msra.mxu0 0.0
        %1035 = vmatprep.subr.mxu0 0.0
        %1036 = vmatpush1.msra.mxu0 0.0
        %1037 = vmatprep.subr.mxu0 0.0
        %1038 = vmatpush1.msra.mxu0 0.0
        %1039 = vmatprep.subr.mxu0 0.0
        %1040 = vmatpush1.msra.mxu0 0.0
        %1041 = vmatprep.subr.mxu0 0.0
        %1042 = vmatpush1.msra.mxu0 0.0
        %1043 = vmatprep.subr.mxu0 0.0
        %1044 = vmatpush1.msra.mxu0 0.0
        %1045 = vmatprep.subr.mxu0 0.0
        %1046 = vmatpush1.msra.mxu0 0.0
        %1047 = vmatprep.subr.mxu0 0.0
        %1048 = vmatpush1.msra.mxu0 0.0
        %1049 = vmatprep.subr.mxu0 0.0
        %1050 = vmatpush1.msra.mxu0 0.0
        %1051 = vmatprep.subr.mxu0 0.0
        %1052 = vmatpush1.msra.mxu0 0.0
        %1053 = vmatprep.subr.mxu0 0.0
        %1054 = vmatpush1.msra.mxu0 0.0
        %1055 = vmatprep.subr.mxu0 0.0
        %1056 = vmatpush1.msra.mxu0 0.0
        %1057 = vmatprep.mubr.f32.mxu0 0.0
        %1058 = vmatmul.mubr.f32.gmra.mrb[0].mxu0 %v527
        %v1059 = vpop.f32.mrb[0].mxu0
        %v1060 = vadd.f32 0.0, %v1059
        %v1061 = vpop.f32.mrb[0].mxu0
        %v1062 = vadd.f32 0.0, %v1061
        %1063 = vmatprep.mubr.f32.mxu0 0.0
        %1064 = vmatmul.mubr.f32.gmra.mrb[0].mxu0 %v530
        %v1065 = vpop.f32.mrb[0].mxu0
        %v1066 = vadd.f32 0.0, %v1065
        %v1067 = vpop.f32.mrb[0].mxu0
        %v1068 = vadd.f32 0.0, %v1067
        %1069 = vdwg.mxu0
        %1070 = vmatprep.subr.mxu0 %v313
        %1071 = vmatpush1.msra.mxu0 %v312
        %1072 = vmatprep.subr.mxu0 %v338
        %1073 = vmatpush1.msra.mxu0 %v337
        %1074 = vmatprep.subr.mxu0 %v363
        %1075 = vmatpush1.msra.mxu0 %v362
        %1076 = vmatprep.subr.mxu0 %v388
        %1077 = vmatpush1.msra.mxu0 %v387
        %1078 = vmatprep.subr.mxu0 %v413
        %1079 = vmatpush1.msra.mxu0 %v412
        %1080 = vmatprep.subr.mxu0 %v438
        %1081 = vmatpush1.msra.mxu0 %v437
        %1082 = vmatprep.subr.mxu0 %v463
        %1083 = vmatpush1.msra.mxu0 %v462
        %1084 = vmatprep.subr.mxu0 %v488
        %1085 = vmatpush1.msra.mxu0 %v487
        %1086 = vmatprep.subr.mxu0 %v573
        %1087 = vmatpush1.msra.mxu0 %v570
        %1088 = vmatprep.subr.mxu0 0.0
        %1089 = vmatpush1.msra.mxu0 0.0
        %1090 = vmatprep.subr.mxu0 0.0
        %1091 = vmatpush1.msra.mxu0 0.0
        %1092 = vmatprep.subr.mxu0 0.0
        %1093 = vmatpush1.msra.mxu0 0.0
        %1094 = vmatprep.subr.mxu0 0.0
        %1095 = vmatpush1.msra.mxu0 0.0
        %1096 = vmatprep.subr.mxu0 0.0
        %1097 = vmatpush1.msra.mxu0 0.0
        %1098 = vmatprep.subr.mxu0 0.0
        %1099 = vmatpush1.msra.mxu0 0.0
        %1100 = vmatprep.subr.mxu0 0.0
        %1101 = vmatpush1.msra.mxu0 0.0
        %1102 = vmatprep.subr.mxu0 0.0
        %1103 = vmatpush1.msra.mxu0 0.0
        %1104 = vmatprep.subr.mxu0 0.0
        %1105 = vmatpush1.msra.mxu0 0.0
        %1106 = vmatprep.subr.mxu0 0.0
        %1107 = vmatpush1.msra.mxu0 0.0
        %1108 = vmatprep.subr.mxu0 0.0
        %1109 = vmatpush1.msra.mxu0 0.0
        %1110 = vmatprep.subr.mxu0 0.0
        %1111 = vmatpush1.msra.mxu0 0.0
        %1112 = vmatprep.subr.mxu0 0.0
        %1113 = vmatpush1.msra.mxu0 0.0
        %1114 = vmatprep.subr.mxu0 0.0
        %1115 = vmatpush1.msra.mxu0 0.0
        %1116 = vmatprep.subr.mxu0 0.0
        %1117 = vmatpush1.msra.mxu0 0.0
        %1118 = vmatprep.subr.mxu0 0.0
        %1119 = vmatpush1.msra.mxu0 0.0
        %1120 = vmatprep.subr.mxu0 0.0
        %1121 = vmatpush1.msra.mxu0 0.0
        %1122 = vmatprep.subr.mxu0 0.0
        %1123 = vmatpush1.msra.mxu0 0.0
        %1124 = vmatprep.subr.mxu0 0.0
        %1125 = vmatpush1.msra.mxu0 0.0
        %1126 = vmatprep.subr.mxu0 0.0
        %1127 = vmatpush1.msra.mxu0 0.0
        %1128 = vmatprep.subr.mxu0 0.0
        %1129 = vmatpush1.msra.mxu0 0.0
        %1130 = vmatprep.subr.mxu0 0.0
        %1131 = vmatpush1.msra.mxu0 0.0
        %1132 = vmatprep.subr.mxu0 0.0
        %1133 = vmatpush1.msra.mxu0 0.0
        %1134 = vmatprep.mubr.f32.mxu0 0.0
        %1135 = vmatmul.mubr.f32.gmra.mrb[0].mxu0 %v527
        %v1136 = vpop.f32.mrb[0].mxu0
        %v1137 = vadd.f32 0.0, %v1136
        %v1138 = vpop.f32.mrb[0].mxu0
        %v1139 = vadd.f32 0.0, %v1138
        %1140 = vmatprep.mubr.f32.mxu0 0.0
        %1141 = vmatmul.mubr.f32.gmra.mrb[0].mxu0 %v530
        %v1142 = vpop.f32.mrb[0].mxu0
        %v1143 = vadd.f32 0.0, %v1142
        %v1144 = vpop.f32.mrb[0].mxu0
        %v1145 = vadd.f32 0.0, %v1144
        %1146 = vdwg.mxu0
        %1147 = vmatprep.subr.mxu0 %v315
        %1148 = vmatpush1.msra.mxu0 %v314
        %1149 = vmatprep.subr.mxu0 %v340
        %1150 = vmatpush1.msra.mxu0 %v339
        %1151 = vmatprep.subr.mxu0 %v365
        %1152 = vmatpush1.msra.mxu0 %v364
        %1153 = vmatprep.subr.mxu0 %v390
        %1154 = vmatpush1.msra.mxu0 %v389
        %1155 = vmatprep.subr.mxu0 %v415
        %1156 = vmatpush1.msra.mxu0 %v414
        %1157 = vmatprep.subr.mxu0 %v440
        %1158 = vmatpush1.msra.mxu0 %v439
        %1159 = vmatprep.subr.mxu0 %v465
        %1160 = vmatpush1.msra.mxu0 %v464
        %1161 = vmatprep.subr.mxu0 %v490
        %1162 = vmatpush1.msra.mxu0 %v489
        %1163 = vmatprep.subr.mxu0 %v579
        %1164 = vmatpush1.msra.mxu0 %v576
        %1165 = vmatprep.subr.mxu0 0.0
        %1166 = vmatpush1.msra.mxu0 0.0
        %1167 = vmatprep.subr.mxu0 0.0
        %1168 = vmatpush1.msra.mxu0 0.0
        %1169 = vmatprep.subr.mxu0 0.0
        %1170 = vmatpush1.msra.mxu0 0.0
        %1171 = vmatprep.subr.mxu0 0.0
        %1172 = vmatpush1.msra.mxu0 0.0
        %1173 = vmatprep.subr.mxu0 0.0
        %1174 = vmatpush1.msra.mxu0 0.0
        %1175 = vmatprep.subr.mxu0 0.0
        %1176 = vmatpush1.msra.mxu0 0.0
        %1177 = vmatprep.subr.mxu0 0.0
        %1178 = vmatpush1.msra.mxu0 0.0
        %1179 = vmatprep.subr.mxu0 0.0
        %1180 = vmatpush1.msra.mxu0 0.0
        %1181 = vmatprep.subr.mxu0 0.0
        %1182 = vmatpush1.msra.mxu0 0.0
        %1183 = vmatprep.subr.mxu0 0.0
        %1184 = vmatpush1.msra.mxu0 0.0
        %1185 = vmatprep.subr.mxu0 0.0
        %1186 = vmatpush1.msra.mxu0 0.0
        %1187 = vmatprep.subr.mxu0 0.0
        %1188 = vmatpush1.msra.mxu0 0.0
        %1189 = vmatprep.subr.mxu0 0.0
        %1190 = vmatpush1.msra.mxu0 0.0
        %1191 = vmatprep.subr.mxu0 0.0
        %1192 = vmatpush1.msra.mxu0 0.0
        %1193 = vmatprep.subr.mxu0 0.0
        %1194 = vmatpush1.msra.mxu0 0.0
        %1195 = vmatprep.subr.mxu0 0.0
        %1196 = vmatpush1.msra.mxu0 0.0
        %1197 = vmatprep.subr.mxu0 0.0
        %1198 = vmatpush1.msra.mxu0 0.0
        %1199 = vmatprep.subr.mxu0 0.0
        %1200 = vmatpush1.msra.mxu0 0.0
        %1201 = vmatprep.subr.mxu0 0.0
        %1202 = vmatpush1.msra.mxu0 0.0
        %1203 = vmatprep.subr.mxu0 0.0
        %1204 = vmatpush1.msra.mxu0 0.0
        %1205 = vmatprep.subr.mxu0 0.0
        %1206 = vmatpush1.msra.mxu0 0.0
        %1207 = vmatprep.subr.mxu0 0.0
        %1208 = vmatpush1.msra.mxu0 0.0
        %1209 = vmatprep.subr.mxu0 0.0
        %1210 = vmatpush1.msra.mxu0 0.0
        %1211 = vmatprep.mubr.f32.mxu0 0.0
        %1212 = vmatmul.mubr.f32.gmra.mrb[0].mxu0 %v527
        %v1213 = vpop.f32.mrb[0].mxu0
        %v1214 = vadd.f32 0.0, %v1213
        %v1215 = vpop.f32.mrb[0].mxu0
        %v1216 = vadd.f32 0.0, %v1215
        %1217 = vmatprep.mubr.f32.mxu0 0.0
        %1218 = vmatmul.mubr.f32.gmra.mrb[0].mxu0 %v530
        %v1219 = vpop.f32.mrb[0].mxu0
        %v1220 = vadd.f32 0.0, %v1219
        %v1221 = vpop.f32.mrb[0].mxu0
        %v1222 = vadd.f32 0.0, %v1221
        %1223 = vdwg.mxu0
        %1224 = vmatprep.subr.mxu0 %v317
        %1225 = vmatpush1.msra.mxu0 %v316
        %1226 = vmatprep.subr.mxu0 %v342
        %1227 = vmatpush1.msra.mxu0 %v341
        %1228 = vmatprep.subr.mxu0 %v367
        %1229 = vmatpush1.msra.mxu0 %v366
        %1230 = vmatprep.subr.mxu0 %v392
        %1231 = vmatpush1.msra.mxu0 %v391
        %1232 = vmatprep.subr.mxu0 %v417
        %1233 = vmatpush1.msra.mxu0 %v416
        %1234 = vmatprep.subr.mxu0 %v442
        %1235 = vmatpush1.msra.mxu0 %v441
        %1236 = vmatprep.subr.mxu0 %v467
        %1237 = vmatpush1.msra.mxu0 %v466
        %1238 = vmatprep.subr.mxu0 %v492
        %1239 = vmatpush1.msra.mxu0 %v491
        %1240 = vmatprep.subr.mxu0 %v585
        %1241 = vmatpush1.msra.mxu0 %v582
        %1242 = vmatprep.subr.mxu0 0.0
        %1243 = vmatpush1.msra.mxu0 0.0
        %1244 = vmatprep.subr.mxu0 0.0
        %1245 = vmatpush1.msra.mxu0 0.0
        %1246 = vmatprep.subr.mxu0 0.0
        %1247 = vmatpush1.msra.mxu0 0.0
        %1248 = vmatprep.subr.mxu0 0.0
        %1249 = vmatpush1.msra.mxu0 0.0
        %1250 = vmatprep.subr.mxu0 0.0
        %1251 = vmatpush1.msra.mxu0 0.0
        %1252 = vmatprep.subr.mxu0 0.0
        %1253 = vmatpush1.msra.mxu0 0.0
        %1254 = vmatprep.subr.mxu0 0.0
        %1255 = vmatpush1.msra.mxu0 0.0
        %1256 = vmatprep.subr.mxu0 0.0
        %1257 = vmatpush1.msra.mxu0 0.0
        %1258 = vmatprep.subr.mxu0 0.0
        %1259 = vmatpush1.msra.mxu0 0.0
        %1260 = vmatprep.subr.mxu0 0.0
        %1261 = vmatpush1.msra.mxu0 0.0
        %1262 = vmatprep.subr.mxu0 0.0
        %1263 = vmatpush1.msra.mxu0 0.0
        %1264 = vmatprep.subr.mxu0 0.0
        %1265 = vmatpush1.msra.mxu0 0.0
        %1266 = vmatprep.subr.mxu0 0.0
        %1267 = vmatpush1.msra.mxu0 0.0
        %1268 = vmatprep.subr.mxu0 0.0
        %1269 = vmatpush1.msra.mxu0 0.0
        %1270 = vmatprep.subr.mxu0 0.0
        %1271 = vmatpush1.msra.mxu0 0.0
        %1272 = vmatprep.subr.mxu0 0.0
        %1273 = vmatpush1.msra.mxu0 0.0
        %1274 = vmatprep.subr.mxu0 0.0
        %1275 = vmatpush1.msra.mxu0 0.0
        %1276 = vmatprep.subr.mxu0 0.0
        %1277 = vmatpush1.msra.mxu0 0.0
        %1278 = vmatprep.subr.mxu0 0.0
        %1279 = vmatpush1.msra.mxu0 0.0
        %1280 = vmatprep.subr.mxu0 0.0
        %1281 = vmatpush1.msra.mxu0 0.0
        %1282 = vmatprep.subr.mxu0 0.0
        %1283 = vmatpush1.msra.mxu0 0.0
        %1284 = vmatprep.subr.mxu0 0.0
        %1285 = vmatpush1.msra.mxu0 0.0
        %1286 = vmatprep.subr.mxu0 0.0
        %1287 = vmatpush1.msra.mxu0 0.0
        %1288 = vmatprep.mubr.f32.mxu0 0.0
        %1289 = vmatmul.mubr.f32.gmra.mrb[0].mxu0 %v527
        %v1290 = vpop.f32.mrb[0].mxu0
        %v1291 = vadd.f32 0.0, %v1290
        %v1292 = vpop.f32.mrb[0].mxu0
        %v1293 = vadd.f32 0.0, %v1292
        %1294 = vmatprep.mubr.f32.mxu0 0.0
        %1295 = vmatmul.mubr.f32.gmra.mrb[0].mxu0 %v530
        %v1296 = vpop.f32.mrb[0].mxu0
        %v1297 = vadd.f32 0.0, %v1296
        %v1298 = vpop.f32.mrb[0].mxu0
        %v1299 = vadd.f32 0.0, %v1298
        %1300 = vdwg.mxu0
        %1301 = vmatprep.subr.mxu0 %v319
        %1302 = vmatpush1.msra.mxu0 %v318
        %1303 = vmatprep.subr.mxu0 %v344
        %1304 = vmatpush1.msra.mxu0 %v343
        %1305 = vmatprep.subr.mxu0 %v369
        %1306 = vmatpush1.msra.mxu0 %v368
        %1307 = vmatprep.subr.mxu0 %v394
        %1308 = vmatpush1.msra.mxu0 %v393
        %1309 = vmatprep.subr.mxu0 %v419
        %1310 = vmatpush1.msra.mxu0 %v418
        %1311 = vmatprep.subr.mxu0 %v444
        %1312 = vmatpush1.msra.mxu0 %v443
        %1313 = vmatprep.subr.mxu0 %v469
        %1314 = vmatpush1.msra.mxu0 %v468
        %1315 = vmatprep.subr.mxu0 %v494
        %1316 = vmatpush1.msra.mxu0 %v493
        %1317 = vmatprep.subr.mxu0 %v591
        %1318 = vmatpush1.msra.mxu0 %v588
        %1319 = vmatprep.subr.mxu0 0.0
        %1320 = vmatpush1.msra.mxu0 0.0
        %1321 = vmatprep.subr.mxu0 0.0
        %1322 = vmatpush1.msra.mxu0 0.0
        %1323 = vmatprep.subr.mxu0 0.0
        %1324 = vmatpush1.msra.mxu0 0.0
        %1325 = vmatprep.subr.mxu0 0.0
        %1326 = vmatpush1.msra.mxu0 0.0
        %1327 = vmatprep.subr.mxu0 0.0
        %1328 = vmatpush1.msra.mxu0 0.0
        %1329 = vmatprep.subr.mxu0 0.0
        %1330 = vmatpush1.msra.mxu0 0.0
        %1331 = vmatprep.subr.mxu0 0.0
        %1332 = vmatpush1.msra.mxu0 0.0
        %1333 = vmatprep.subr.mxu0 0.0
        %1334 = vmatpush1.msra.mxu0 0.0
        %1335 = vmatprep.subr.mxu0 0.0
        %1336 = vmatpush1.msra.mxu0 0.0
        %1337 = vmatprep.subr.mxu0 0.0
        %1338 = vmatpush1.msra.mxu0 0.0
        %1339 = vmatprep.subr.mxu0 0.0
        %1340 = vmatpush1.msra.mxu0 0.0
        %1341 = vmatprep.subr.mxu0 0.0
        %1342 = vmatpush1.msra.mxu0 0.0
        %1343 = vmatprep.subr.mxu0 0.0
        %1344 = vmatpush1.msra.mxu0 0.0
        %1345 = vmatprep.subr.mxu0 0.0
        %1346 = vmatpush1.msra.mxu0 0.0
        %1347 = vmatprep.subr.mxu0 0.0
        %1348 = vmatpush1.msra.mxu0 0.0
        %1349 = vmatprep.subr.mxu0 0.0
        %1350 = vmatpush1.msra.mxu0 0.0
        %1351 = vmatprep.subr.mxu0 0.0
        %1352 = vmatpush1.msra.mxu0 0.0
        %1353 = vmatprep.subr.mxu0 0.0
        %1354 = vmatpush1.msra.mxu0 0.0
        %1355 = vmatprep.subr.mxu0 0.0
        %1356 = vmatpush1.msra.mxu0 0.0
        %1357 = vmatprep.subr.mxu0 0.0
        %1358 = vmatpush1.msra.mxu0 0.0
        %1359 = vmatprep.subr.mxu0 0.0
        %1360 = vmatpush1.msra.mxu0 0.0
        %1361 = vmatprep.subr.mxu0 0.0
        %1362 = vmatpush1.msra.mxu0 0.0
        %1363 = vmatprep.subr.mxu0 0.0
        %1364 = vmatpush1.msra.mxu0 0.0
        %1365 = vmatprep.mubr.f32.mxu0 0.0
        %1366 = vmatmul.mubr.f32.gmra.mrb[0].mxu0 %v527
        %v1367 = vpop.f32.mrb[0].mxu0
        %v1368 = vadd.f32 0.0, %v1367
        %v1369 = vpop.f32.mrb[0].mxu0
        %v1370 = vadd.f32 0.0, %v1369
        %1371 = vmatprep.mubr.f32.mxu0 0.0
        %1372 = vmatmul.mubr.f32.gmra.mrb[0].mxu0 %v530
        %v1373 = vpop.f32.mrb[0].mxu0
        %v1374 = vadd.f32 0.0, %v1373
        %v1375 = vpop.f32.mrb[0].mxu0
        %v1376 = vadd.f32 0.0, %v1375
        %1377 = vdwg.mxu0
        %1378 = vmatprep.subr.mxu0 %v321
        %1379 = vmatpush1.msra.mxu0 %v320
        %1380 = vmatprep.subr.mxu0 %v346
        %1381 = vmatpush1.msra.mxu0 %v345
        %1382 = vmatprep.subr.mxu0 %v371
        %1383 = vmatpush1.msra.mxu0 %v370
        %1384 = vmatprep.subr.mxu0 %v396
        %1385 = vmatpush1.msra.mxu0 %v395
        %1386 = vmatprep.subr.mxu0 %v421
        %1387 = vmatpush1.msra.mxu0 %v420
        %1388 = vmatprep.subr.mxu0 %v446
        %1389 = vmatpush1.msra.mxu0 %v445
        %1390 = vmatprep.subr.mxu0 %v471
        %1391 = vmatpush1.msra.mxu0 %v470
        %1392 = vmatprep.subr.mxu0 %v496
        %1393 = vmatpush1.msra.mxu0 %v495
        %1394 = vmatprep.subr.mxu0 %v597
        %1395 = vmatpush1.msra.mxu0 %v594
        %1396 = vmatprep.subr.mxu0 0.0
        %1397 = vmatpush1.msra.mxu0 0.0
        %1398 = vmatprep.subr.mxu0 0.0
        %1399 = vmatpush1.msra.mxu0 0.0
        %1400 = vmatprep.subr.mxu0 0.0
        %1401 = vmatpush1.msra.mxu0 0.0
        %1402 = vmatprep.subr.mxu0 0.0
        %1403 = vmatpush1.msra.mxu0 0.0
        %1404 = vmatprep.subr.mxu0 0.0
        %1405 = vmatpush1.msra.mxu0 0.0
        %1406 = vmatprep.subr.mxu0 0.0
        %1407 = vmatpush1.msra.mxu0 0.0
        %1408 = vmatprep.subr.mxu0 0.0
        %1409 = vmatpush1.msra.mxu0 0.0
        %1410 = vmatprep.subr.mxu0 0.0
        %1411 = vmatpush1.msra.mxu0 0.0
        %1412 = vmatprep.subr.mxu0 0.0
        %1413 = vmatpush1.msra.mxu0 0.0
        %1414 = vmatprep.subr.mxu0 0.0
        %1415 = vmatpush1.msra.mxu0 0.0
        %1416 = vmatprep.subr.mxu0 0.0
        %1417 = vmatpush1.msra.mxu0 0.0
        %1418 = vmatprep.subr.mxu0 0.0
        %1419 = vmatpush1.msra.mxu0 0.0
        %1420 = vmatprep.subr.mxu0 0.0
        %1421 = vmatpush1.msra.mxu0 0.0
        %1422 = vmatprep.subr.mxu0 0.0
        %1423 = vmatpush1.msra.mxu0 0.0
        %1424 = vmatprep.subr.mxu0 0.0
        %1425 = vmatpush1.msra.mxu0 0.0
        %1426 = vmatprep.subr.mxu0 0.0
        %1427 = vmatpush1.msra.mxu0 0.0
        %1428 = vmatprep.subr.mxu0 0.0
        %1429 = vmatpush1.msra.mxu0 0.0
        %1430 = vmatprep.subr.mxu0 0.0
        %1431 = vmatpush1.msra.mxu0 0.0
        %1432 = vmatprep.subr.mxu0 0.0
        %1433 = vmatpush1.msra.mxu0 0.0
        %1434 = vmatprep.subr.mxu0 0.0
        %1435 = vmatpush1.msra.mxu0 0.0
        %1436 = vmatprep.subr.mxu0 0.0
        %1437 = vmatpush1.msra.mxu0 0.0
        %1438 = vmatprep.subr.mxu0 0.0
        %1439 = vmatpush1.msra.mxu0 0.0
        %1440 = vmatprep.subr.mxu0 0.0
        %1441 = vmatpush1.msra.mxu0 0.0
        %1442 = vmatprep.mubr.f32.mxu0 0.0
        %1443 = vmatmul.mubr.f32.gmra.mrb[0].mxu0 %v527
        %v1444 = vpop.f32.mrb[0].mxu0
        %v1445 = vadd.f32 0.0, %v1444
        %v1446 = vpop.f32.mrb[0].mxu0
        %v1447 = vadd.f32 0.0, %v1446
        %1448 = vmatprep.mubr.f32.mxu0 0.0
        %1449 = vmatmul.mubr.f32.gmra.mrb[0].mxu0 %v530
        %v1450 = vpop.f32.mrb[0].mxu0
        %v1451 = vadd.f32 0.0, %v1450
        %v1452 = vpop.f32.mrb[0].mxu0
        %v1453 = vadd.f32 0.0, %v1452
        %1454 = vdwg.mxu0
        %1455 = vmatprep.subr.mxu0 %v323
        %1456 = vmatpush1.msra.mxu0 %v322
        %1457 = vmatprep.subr.mxu0 %v348
        %1458 = vmatpush1.msra.mxu0 %v347
        %1459 = vmatprep.subr.mxu0 %v373
        %1460 = vmatpush1.msra.mxu0 %v372
        %1461 = vmatprep.subr.mxu0 %v398
        %1462 = vmatpush1.msra.mxu0 %v397
        %1463 = vmatprep.subr.mxu0 %v423
        %1464 = vmatpush1.msra.mxu0 %v422
        %1465 = vmatprep.subr.mxu0 %v448
        %1466 = vmatpush1.msra.mxu0 %v447
        %1467 = vmatprep.subr.mxu0 %v473
        %1468 = vmatpush1.msra.mxu0 %v472
        %1469 = vmatprep.subr.mxu0 %v498
        %1470 = vmatpush1.msra.mxu0 %v497
        %1471 = vmatprep.subr.mxu0 %v603
        %1472 = vmatpush1.msra.mxu0 %v600
        %1473 = vmatprep.subr.mxu0 0.0
        %1474 = vmatpush1.msra.mxu0 0.0
        %1475 = vmatprep.subr.mxu0 0.0
        %1476 = vmatpush1.msra.mxu0 0.0
        %1477 = vmatprep.subr.mxu0 0.0
        %1478 = vmatpush1.msra.mxu0 0.0
        %1479 = vmatprep.subr.mxu0 0.0
        %1480 = vmatpush1.msra.mxu0 0.0
        %1481 = vmatprep.subr.mxu0 0.0
        %1482 = vmatpush1.msra.mxu0 0.0
        %1483 = vmatprep.subr.mxu0 0.0
        %1484 = vmatpush1.msra.mxu0 0.0
        %1485 = vmatprep.subr.mxu0 0.0
        %1486 = vmatpush1.msra.mxu0 0.0
        %1487 = vmatprep.subr.mxu0 0.0
        %1488 = vmatpush1.msra.mxu0 0.0
        %1489 = vmatprep.subr.mxu0 0.0
        %1490 = vmatpush1.msra.mxu0 0.0
        %1491 = vmatprep.subr.mxu0 0.0
        %1492 = vmatpush1.msra.mxu0 0.0
        %1493 = vmatprep.subr.mxu0 0.0
        %1494 = vmatpush1.msra.mxu0 0.0
        %1495 = vmatprep.subr.mxu0 0.0
        %1496 = vmatpush1.msra.mxu0 0.0
        %1497 = vmatprep.subr.mxu0 0.0
        %1498 = vmatpush1.msra.mxu0 0.0
        %1499 = vmatprep.subr.mxu0 0.0
        %1500 = vmatpush1.msra.mxu0 0.0
        %1501 = vmatprep.subr.mxu0 0.0
        %1502 = vmatpush1.msra.mxu0 0.0
        %1503 = vmatprep.subr.mxu0 0.0
        %1504 = vmatpush1.msra.mxu0 0.0
        %1505 = vmatprep.subr.mxu0 0.0
        %1506 = vmatpush1.msra.mxu0 0.0
        %1507 = vmatprep.subr.mxu0 0.0
        %1508 = vmatpush1.msra.mxu0 0.0
        %1509 = vmatprep.subr.mxu0 0.0
        %1510 = vmatpush1.msra.mxu0 0.0
        %1511 = vmatprep.subr.mxu0 0.0
        %1512 = vmatpush1.msra.mxu0 0.0
        %1513 = vmatprep.subr.mxu0 0.0
        %1514 = vmatpush1.msra.mxu0 0.0
        %1515 = vmatprep.subr.mxu0 0.0
        %1516 = vmatpush1.msra.mxu0 0.0
        %1517 = vmatprep.subr.mxu0 0.0
        %1518 = vmatpush1.msra.mxu0 0.0
        %1519 = vmatprep.mubr.f32.mxu0 0.0
        %1520 = vmatmul.mubr.f32.gmra.mrb[0].mxu0 %v527
        %v1521 = vpop.f32.mrb[0].mxu0
        %v1522 = vadd.f32 0.0, %v1521
        %v1523 = vpop.f32.mrb[0].mxu0
        %v1524 = vadd.f32 0.0, %v1523
        %1525 = vmatprep.mubr.f32.mxu0 0.0
        %1526 = vmatmul.mubr.f32.gmra.mrb[0].mxu0 %v530
        %v1527 = vpop.f32.mrb[0].mxu0
        %v1528 = vadd.f32 0.0, %v1527
        %v1529 = vpop.f32.mrb[0].mxu0
        %v1530 = vadd.f32 0.0, %v1529
        %1531 = vdwg.mxu0
        %1532 = vmatprep.subr.mxu0 0.0
        %1533 = vmatpush1.msra.mxu0 %v324
        %1534 = vmatprep.subr.mxu0 0.0
        %1535 = vmatpush1.msra.mxu0 %v349
        %1536 = vmatprep.subr.mxu0 0.0
        %1537 = vmatpush1.msra.mxu0 %v374
        %1538 = vmatprep.subr.mxu0 0.0
        %1539 = vmatpush1.msra.mxu0 %v399
        %1540 = vmatprep.subr.mxu0 0.0
        %1541 = vmatpush1.msra.mxu0 %v424
        %1542 = vmatprep.subr.mxu0 0.0
        %1543 = vmatpush1.msra.mxu0 %v449
        %1544 = vmatprep.subr.mxu0 0.0
        %1545 = vmatpush1.msra.mxu0 %v474
        %1546 = vmatprep.subr.mxu0 0.0
        %1547 = vmatpush1.msra.mxu0 %v499
        %1548 = vmatprep.subr.mxu0 0.0
        %1549 = vmatpush1.msra.mxu0 %v606
        %1550 = vmatprep.subr.mxu0 0.0
        %1551 = vmatpush1.msra.mxu0 0.0
        %1552 = vmatprep.subr.mxu0 0.0
        %1553 = vmatpush1.msra.mxu0 0.0
        %1554 = vmatprep.subr.mxu0 0.0
        %1555 = vmatpush1.msra.mxu0 0.0
        %1556 = vmatprep.subr.mxu0 0.0
        %1557 = vmatpush1.msra.mxu0 0.0
        %1558 = vmatprep.subr.mxu0 0.0
        %1559 = vmatpush1.msra.mxu0 0.0
        %1560 = vmatprep.subr.mxu0 0.0
        %1561 = vmatpush1.msra.mxu0 0.0
        %1562 = vmatprep.subr.mxu0 0.0
        %1563 = vmatpush1.msra.mxu0 0.0
        %1564 = vmatprep.subr.mxu0 0.0
        %1565 = vmatpush1.msra.mxu0 0.0
        %1566 = vmatprep.subr.mxu0 0.0
        %1567 = vmatpush1.msra.mxu0 0.0
        %1568 = vmatprep.subr.mxu0 0.0
        %1569 = vmatpush1.msra.mxu0 0.0
        %1570 = vmatprep.subr.mxu0 0.0
        %1571 = vmatpush1.msra.mxu0 0.0
        %1572 = vmatprep.subr.mxu0 0.0
        %1573 = vmatpush1.msra.mxu0 0.0
        %1574 = vmatprep.subr.mxu0 0.0
        %1575 = vmatpush1.msra.mxu0 0.0
        %1576 = vmatprep.subr.mxu0 0.0
        %1577 = vmatpush1.msra.mxu0 0.0
        %1578 = vmatprep.subr.mxu0 0.0
        %1579 = vmatpush1.msra.mxu0 0.0
        %1580 = vmatprep.subr.mxu0 0.0
        %1581 = vmatpush1.msra.mxu0 0.0
        %1582 = vmatprep.subr.mxu0 0.0
        %1583 = vmatpush1.msra.mxu0 0.0
        %1584 = vmatprep.subr.mxu0 0.0
        %1585 = vmatpush1.msra.mxu0 0.0
        %1586 = vmatprep.subr.mxu0 0.0
        %1587 = vmatpush1.msra.mxu0 0.0
        %1588 = vmatprep.subr.mxu0 0.0
        %1589 = vmatpush1.msra.mxu0 0.0
        %1590 = vmatprep.subr.mxu0 0.0
        %1591 = vmatpush1.msra.mxu0 0.0
        %1592 = vmatprep.subr.mxu0 0.0
        %1593 = vmatpush1.msra.mxu0 0.0
        %1594 = vmatprep.subr.mxu0 0.0
        %1595 = vmatpush1.msra.mxu0 0.0
        %1596 = vmatprep.mubr.f32.mxu0 0.0
        %1597 = vmatmul.mubr.f32.gmra.mrb[0].mxu0 %v527
        %v1598 = vpop.f32.mrb[0].mxu0
        %v1599 = vadd.f32 0.0, %v1598
        %v1600 = vpop.f32.mrb[0].mxu0
        %1601 = vmatprep.mubr.f32.mxu0 0.0
        %1602 = vmatmul.mubr.f32.gmra.mrb[0].mxu0 %v530
        %v1603 = vpop.f32.mrb[0].mxu0
        %v1604 = vadd.f32 0.0, %v1603
        %v1605 = vpop.f32.mrb[0].mxu0
        %1606 = vdwg.mxu0
        %v1607 = vld [vmem:[%s232] sm:$0xff]
        %v1608 = vld [vmem:[%s232 + $0x8] sm:$0xff]
        %v1609 = vld [vmem:[%s232 + $0x10] sm:$0xff]
        %v1610 = vld [vmem:[%s232 + $0x18] sm:$0xff]
        %v1611 = vld [vmem:[%s232 + $0x20] sm:$0xff]
        %v1612 = vld [vmem:[%s232 + $0x28] sm:$0xff]
        %v1613 = vld [vmem:[%s232 + $0x30] sm:$0x3]
        %v1614 = vld [vmem:[%s232 + $0x32] sm:$0xff]
        %v1615 = vld [vmem:[%s232 + $0x3a] sm:$0xff]
        %v1616 = vld [vmem:[%s232 + $0x42] sm:$0xff]
        %v1617 = vld [vmem:[%s232 + $0x4a] sm:$0xff]
        %v1618 = vld [vmem:[%s232 + $0x52] sm:$0xff]
        %v1619 = vld [vmem:[%s232 + $0x5a] sm:$0xff]
        %v1620 = vld [vmem:[%s232 + $0x62] sm:$0x3]
        %v1621 = vld [vmem:[%s232 + $0x64] sm:$0xff]
        %v1622 = vld [vmem:[%s232 + $0x6c] sm:$0xff]
        %v1623 = vld [vmem:[%s232 + $0x74] sm:$0xff]
        %v1624 = vld [vmem:[%s232 + $0x7c] sm:$0xff]
        %v1625 = vld [vmem:[%s232 + $0x84] sm:$0xff]
        %v1626 = vld [vmem:[%s232 + $0x8c] sm:$0xff]
        %v1627 = vld [vmem:[%s232 + $0x94] sm:$0x3]
        %v1628 = vld [vmem:[%s232 + $0x96] sm:$0xff]
        %v1629 = vld [vmem:[%s232 + $0x9e] sm:$0xff]
        %v1630 = vld [vmem:[%s232 + $0xa6] sm:$0xff]
        %v1631 = vld [vmem:[%s232 + $0xae] sm:$0xff]
        %v1632 = vld [vmem:[%s232 + $0xb6] sm:$0xff]
        %v1633 = vld [vmem:[%s232 + $0xbe] sm:$0xff]
        %v1634 = vld [vmem:[%s232 + $0xc6] sm:$0x3]
        %v1635 = vld [vmem:[%s232 + $0xc8] sm:$0xff]
        %v1636 = vld [vmem:[%s232 + $0xd0] sm:$0xff]
        %v1637 = vld [vmem:[%s232 + $0xd8] sm:$0xff]
        %v1638 = vld [vmem:[%s232 + $0xe0] sm:$0xff]
        %v1639 = vld [vmem:[%s232 + $0xe8] sm:$0xff]
        %v1640 = vld [vmem:[%s232 + $0xf0] sm:$0xff]
        %v1641 = vld [vmem:[%s232 + $0xf8] sm:$0x3]
        %v1642 = vld [vmem:[%s232 + $0xfa] sm:$0xff]
        %v1643 = vld [vmem:[%s232 + $0x102] sm:$0xff]
        %v1644 = vld [vmem:[%s232 + $0x10a] sm:$0xff]
        %v1645 = vld [vmem:[%s232 + $0x112] sm:$0xff]
        %v1646 = vld [vmem:[%s232 + $0x11a] sm:$0xff]
        %v1647 = vld [vmem:[%s232 + $0x122] sm:$0xff]
        %v1648 = vld [vmem:[%s232 + $0x12a] sm:$0x3]
        %v1649 = vld [vmem:[%s232 + $0x12c] sm:$0xff]
        %v1650 = vld [vmem:[%s232 + $0x134] sm:$0xff]
        %v1651 = vld [vmem:[%s232 + $0x13c] sm:$0xff]
        %v1652 = vld [vmem:[%s232 + $0x144] sm:$0xff]
        %v1653 = vld [vmem:[%s232 + $0x14c] sm:$0xff]
        %v1654 = vld [vmem:[%s232 + $0x154] sm:$0xff]
        %v1655 = vld [vmem:[%s232 + $0x15c] sm:$0x3]
        %v1656 = vld [vmem:[%s232 + $0x15e] sm:$0xff]
        %v1657 = vld [vmem:[%s232 + $0x166] sm:$0xff]
        %v1658 = vld [vmem:[%s232 + $0x16e] sm:$0xff]
        %v1659 = vld [vmem:[%s232 + $0x176] sm:$0xff]
        %v1660 = vld [vmem:[%s232 + $0x17e] sm:$0xff]
        %v1661 = vld [vmem:[%s232 + $0x186] sm:$0xff]
        %v1662 = vld [vmem:[%s232 + $0x18e] sm:$0x3]
        %vm1663 = vcmp.eq.f32.partialorder %v675, 0.0
        %vm1664 = vcmp.eq.f32.partialorder %v677, 0.0
        %vm1665 = vcmp.eq.f32.partialorder %v752, 0.0
        %vm1666 = vcmp.eq.f32.partialorder %v754, 0.0
        %vm1667 = vcmp.eq.f32.partialorder %v829, 0.0
        %vm1668 = vcmp.eq.f32.partialorder %v831, 0.0
        %vm1669 = vcmp.eq.f32.partialorder %v906, 0.0
        %vm1670 = vcmp.eq.f32.partialorder %v908, 0.0
        %vm1671 = vcmp.eq.f32.partialorder %v983, 0.0
        %vm1672 = vcmp.eq.f32.partialorder %v985, 0.0
        %vm1673 = vcmp.eq.f32.partialorder %v1060, 0.0
        %vm1674 = vcmp.eq.f32.partialorder %v1062, 0.0
        %vm1675 = vcmp.eq.f32.partialorder %v1137, 0.0
        %vm1676 = vcmp.eq.f32.partialorder %v1139, 0.0
        %vm1677 = vcmp.eq.f32.partialorder %v1214, 0.0
        %vm1678 = vcmp.eq.f32.partialorder %v1216, 0.0
        %vm1679 = vcmp.eq.f32.partialorder %v1291, 0.0
        %vm1680 = vcmp.eq.f32.partialorder %v1293, 0.0
        %vm1681 = vcmp.eq.f32.partialorder %v1368, 0.0
        %vm1682 = vcmp.eq.f32.partialorder %v1370, 0.0
        %vm1683 = vcmp.eq.f32.partialorder %v1445, 0.0
        %vm1684 = vcmp.eq.f32.partialorder %v1447, 0.0
        %vm1685 = vcmp.eq.f32.partialorder %v1522, 0.0
        %vm1686 = vcmp.eq.f32.partialorder %v1524, 0.0
        %vm1687 = vcmp.eq.f32.partialorder %v1599, 0.0
        %vm1688 = vcmp.eq.f32.partialorder %v681, 0.0
        %vm1689 = vcmp.eq.f32.partialorder %v683, 0.0
        %vm1690 = vcmp.eq.f32.partialorder %v758, 0.0
        %vm1691 = vcmp.eq.f32.partialorder %v760, 0.0
        %vm1692 = vcmp.eq.f32.partialorder %v835, 0.0
        %vm1693 = vcmp.eq.f32.partialorder %v837, 0.0
        %vm1694 = vcmp.eq.f32.partialorder %v912, 0.0
        %vm1695 = vcmp.eq.f32.partialorder %v914, 0.0
        %vm1696 = vcmp.eq.f32.partialorder %v989, 0.0
        %vm1697 = vcmp.eq.f32.partialorder %v991, 0.0
        %vm1698 = vcmp.eq.f32.partialorder %v1066, 0.0
        %vm1699 = vcmp.eq.f32.partialorder %v1068, 0.0
        %vm1700 = vcmp.eq.f32.partialorder %v1143, 0.0
        %vm1701 = vcmp.eq.f32.partialorder %v1145, 0.0
        %vm1702 = vcmp.eq.f32.partialorder %v1220, 0.0
        %vm1703 = vcmp.eq.f32.partialorder %v1222, 0.0
        %vm1704 = vcmp.eq.f32.partialorder %v1297, 0.0
        %vm1705 = vcmp.eq.f32.partialorder %v1299, 0.0
        %vm1706 = vcmp.eq.f32.partialorder %v1374, 0.0
        %vm1707 = vcmp.eq.f32.partialorder %v1376, 0.0
        %vm1708 = vcmp.eq.f32.partialorder %v1451, 0.0
        %vm1709 = vcmp.eq.f32.partialorder %v1453, 0.0
        %vm1710 = vcmp.eq.f32.partialorder %v1528, 0.0
        %vm1711 = vcmp.eq.f32.partialorder %v1530, 0.0
        %vm1712 = vcmp.eq.f32.partialorder %v1604, 0.0
        %v1769 = vcombine.low %v1607, %v1614
        %v1770 = vcombine.high %v1607, %v1614
        %v1771 = vcombine.low %v1621, %v1628
        %v1772 = vcombine.high %v1621, %v1628
        %v1774 = vunpack.c.l.s4 1983009808
        %v1775 = vunpack.c.0.s8 %v1774
        %v1776 = vlaneseq
        %v1777 = vshrl.u32 %v1776, 7
        %v1778 = vsub.s32 %v1775, %v1777
        %v1779 = vrot.slane %v1769, %v1778
        %v1781 = vunpack.c.l.s4 1983009808
        %v1782 = vunpack.c.0.s8 %v1781
        %v1783 = vlaneseq
        %v1784 = vshrl.u32 %v1783, 7
        %v1785 = vsub.s32 %v1782, %v1784
        %v1786 = vrot.slane %v1770, %v1785
        %v1788 = vunpack.c.l.s4 1983009808
        %v1789 = vunpack.c.0.s8 %v1788
        %v1790 = vlaneseq
        %v1791 = vshrl.u32 %v1790, 7
        %v1792 = vsub.s32 %v1789, %v1791
        %v1793 = vrot.slane %v1771, %v1792
        %v1795 = vunpack.c.l.s4 1983009808
        %v1796 = vunpack.c.0.s8 %v1795
        %v1797 = vlaneseq
        %v1798 = vshrl.u32 %v1797, 7
        %v1799 = vsub.s32 %v1796, %v1798
        %v1800 = vrot.slane %v1772, %v1799
        %v1801 = vcombine.low %v1779, %v1793
        %v1802 = vcombine.high %v1779, %v1793
        %v1803 = vcombine.low %v1786, %v1800
        %v1804 = vcombine.high %v1786, %v1800
        %v1805 = vcombine.low %v1608, %v1615
        %v1806 = vcombine.high %v1608, %v1615
        %v1807 = vcombine.low %v1622, %v1629
        %v1808 = vcombine.high %v1622, %v1629
        %v1810 = vunpack.c.l.s4 1983009808
        %v1811 = vunpack.c.0.s8 %v1810
        %v1812 = vlaneseq
        %v1813 = vshrl.u32 %v1812, 7
        %v1814 = vsub.s32 %v1811, %v1813
        %v1815 = vrot.slane %v1805, %v1814
        %v1817 = vunpack.c.l.s4 1983009808
        %v1818 = vunpack.c.0.s8 %v1817
        %v1819 = vlaneseq
        %v1820 = vshrl.u32 %v1819, 7
        %v1821 = vsub.s32 %v1818, %v1820
        %v1822 = vrot.slane %v1806, %v1821
        %v1824 = vunpack.c.l.s4 1983009808
        %v1825 = vunpack.c.0.s8 %v1824
        %v1826 = vlaneseq
        %v1827 = vshrl.u32 %v1826, 7
        %v1828 = vsub.s32 %v1825, %v1827
        %v1829 = vrot.slane %v1807, %v1828
        %v1831 = vunpack.c.l.s4 1983009808
        %v1832 = vunpack.c.0.s8 %v1831
        %v1833 = vlaneseq
        %v1834 = vshrl.u32 %v1833, 7
        %v1835 = vsub.s32 %v1832, %v1834
        %v1836 = vrot.slane %v1808, %v1835
        %v1837 = vcombine.low %v1815, %v1829
        %v1838 = vcombine.high %v1815, %v1829
        %v1839 = vcombine.low %v1822, %v1836
        %v1840 = vcombine.high %v1822, %v1836
        %v1841 = vcombine.low %v1609, %v1616
        %v1842 = vcombine.high %v1609, %v1616
        %v1843 = vcombine.low %v1623, %v1630
        %v1844 = vcombine.high %v1623, %v1630
        %v1846 = vunpack.c.l.s4 1983009808
        %v1847 = vunpack.c.0.s8 %v1846
        %v1848 = vlaneseq
        %v1849 = vshrl.u32 %v1848, 7
        %v1850 = vsub.s32 %v1847, %v1849
        %v1851 = vrot.slane %v1841, %v1850
        %v1853 = vunpack.c.l.s4 1983009808
        %v1854 = vunpack.c.0.s8 %v1853
        %v1855 = vlaneseq
        %v1856 = vshrl.u32 %v1855, 7
        %v1857 = vsub.s32 %v1854, %v1856
        %v1858 = vrot.slane %v1842, %v1857
        %v1860 = vunpack.c.l.s4 1983009808
        %v1861 = vunpack.c.0.s8 %v1860
        %v1862 = vlaneseq
        %v1863 = vshrl.u32 %v1862, 7
        %v1864 = vsub.s32 %v1861, %v1863
        %v1865 = vrot.slane %v1843, %v1864
        %v1867 = vunpack.c.l.s4 1983009808
        %v1868 = vunpack.c.0.s8 %v1867
        %v1869 = vlaneseq
        %v1870 = vshrl.u32 %v1869, 7
        %v1871 = vsub.s32 %v1868, %v1870
        %v1872 = vrot.slane %v1844, %v1871
        %v1873 = vcombine.low %v1851, %v1865
        %v1874 = vcombine.high %v1851, %v1865
        %v1875 = vcombine.low %v1858, %v1872
        %v1876 = vcombine.high %v1858, %v1872
        %v1877 = vcombine.low %v1610, %v1617
        %v1878 = vcombine.high %v1610, %v1617
        %v1879 = vcombine.low %v1624, %v1631
        %v1880 = vcombine.high %v1624, %v1631
        %v1882 = vunpack.c.l.s4 1983009808
        %v1883 = vunpack.c.0.s8 %v1882
        %v1884 = vlaneseq
        %v1885 = vshrl.u32 %v1884, 7
        %v1886 = vsub.s32 %v1883, %v1885
        %v1887 = vrot.slane %v1877, %v1886
        %v1889 = vunpack.c.l.s4 1983009808
        %v1890 = vunpack.c.0.s8 %v1889
        %v1891 = vlaneseq
        %v1892 = vshrl.u32 %v1891, 7
        %v1893 = vsub.s32 %v1890, %v1892
        %v1894 = vrot.slane %v1878, %v1893
        %v1896 = vunpack.c.l.s4 1983009808
        %v1897 = vunpack.c.0.s8 %v1896
        %v1898 = vlaneseq
        %v1899 = vshrl.u32 %v1898, 7
        %v1900 = vsub.s32 %v1897, %v1899
        %v1901 = vrot.slane %v1879, %v1900
        %v1903 = vunpack.c.l.s4 1983009808
        %v1904 = vunpack.c.0.s8 %v1903
        %v1905 = vlaneseq
        %v1906 = vshrl.u32 %v1905, 7
        %v1907 = vsub.s32 %v1904, %v1906
        %v1908 = vrot.slane %v1880, %v1907
        %v1909 = vcombine.low %v1887, %v1901
        %v1910 = vcombine.high %v1887, %v1901
        %v1911 = vcombine.low %v1894, %v1908
        %v1912 = vcombine.high %v1894, %v1908
        %v1913 = vcombine.low %v1611, %v1618
        %v1914 = vcombine.high %v1611, %v1618
        %v1915 = vcombine.low %v1625, %v1632
        %v1916 = vcombine.high %v1625, %v1632
        %v1918 = vunpack.c.l.s4 1983009808
        %v1919 = vunpack.c.0.s8 %v1918
        %v1920 = vlaneseq
        %v1921 = vshrl.u32 %v1920, 7
        %v1922 = vsub.s32 %v1919, %v1921
        %v1923 = vrot.slane %v1913, %v1922
        %v1925 = vunpack.c.l.s4 1983009808
        %v1926 = vunpack.c.0.s8 %v1925
        %v1927 = vlaneseq
        %v1928 = vshrl.u32 %v1927, 7
        %v1929 = vsub.s32 %v1926, %v1928
        %v1930 = vrot.slane %v1914, %v1929
        %v1932 = vunpack.c.l.s4 1983009808
        %v1933 = vunpack.c.0.s8 %v1932
        %v1934 = vlaneseq
        %v1935 = vshrl.u32 %v1934, 7
        %v1936 = vsub.s32 %v1933, %v1935
        %v1937 = vrot.slane %v1915, %v1936
        %v1939 = vunpack.c.l.s4 1983009808
        %v1940 = vunpack.c.0.s8 %v1939
        %v1941 = vlaneseq
        %v1942 = vshrl.u32 %v1941, 7
        %v1943 = vsub.s32 %v1940, %v1942
        %v1944 = vrot.slane %v1916, %v1943
        %v1945 = vcombine.low %v1923, %v1937
        %v1946 = vcombine.high %v1923, %v1937
        %v1947 = vcombine.low %v1930, %v1944
        %v1948 = vcombine.high %v1930, %v1944
        %v1949 = vcombine.low %v1612, %v1619
        %v1950 = vcombine.high %v1612, %v1619
        %v1951 = vcombine.low %v1626, %v1633
        %v1952 = vcombine.high %v1626, %v1633
        %v1954 = vunpack.c.l.s4 1983009808
        %v1955 = vunpack.c.0.s8 %v1954
        %v1956 = vlaneseq
        %v1957 = vshrl.u32 %v1956, 7
        %v1958 = vsub.s32 %v1955, %v1957
        %v1959 = vrot.slane %v1949, %v1958
        %v1961 = vunpack.c.l.s4 1983009808
        %v1962 = vunpack.c.0.s8 %v1961
        %v1963 = vlaneseq
        %v1964 = vshrl.u32 %v1963, 7
        %v1965 = vsub.s32 %v1962, %v1964
        %v1966 = vrot.slane %v1950, %v1965
        %v1968 = vunpack.c.l.s4 1983009808
        %v1969 = vunpack.c.0.s8 %v1968
        %v1970 = vlaneseq
        %v1971 = vshrl.u32 %v1970, 7
        %v1972 = vsub.s32 %v1969, %v1971
        %v1973 = vrot.slane %v1951, %v1972
        %v1975 = vunpack.c.l.s4 1983009808
        %v1976 = vunpack.c.0.s8 %v1975
        %v1977 = vlaneseq
        %v1978 = vshrl.u32 %v1977, 7
        %v1979 = vsub.s32 %v1976, %v1978
        %v1980 = vrot.slane %v1952, %v1979
        %v1981 = vcombine.low %v1959, %v1973
        %v1982 = vcombine.high %v1959, %v1973
        %v1983 = vcombine.low %v1966, %v1980
        %v1984 = vcombine.high %v1966, %v1980
        %v1985 = vcombine.low %v1613, %v1620
        %v1986 = vcombine.low %v1627, %v1634
        %v1988 = vunpack.c.l.s4 1983009808
        %v1989 = vunpack.c.0.s8 %v1988
        %v1990 = vlaneseq
        %v1991 = vshrl.u32 %v1990, 7
        %v1992 = vsub.s32 %v1989, %v1991
        %v1993 = vrot.slane %v1985, %v1992
        %v1995 = vunpack.c.l.s4 1983009808
        %v1996 = vunpack.c.0.s8 %v1995
        %v1997 = vlaneseq
        %v1998 = vshrl.u32 %v1997, 7
        %v1999 = vsub.s32 %v1996, %v1998
        %v2000 = vrot.slane %v1986, %v1999
        %v2001 = vcombine.low %v1993, %v2000
        %v2002 = vcombine.low %v1635, %v1642
        %v2003 = vcombine.high %v1635, %v1642
        %v2004 = vcombine.low %v1649, %v1656
        %v2005 = vcombine.high %v1649, %v1656
        %v2007 = vunpack.c.l.s4 1983009808
        %v2008 = vunpack.c.0.s8 %v2007
        %v2009 = vlaneseq
        %v2010 = vshrl.u32 %v2009, 7
        %v2011 = vsub.s32 %v2008, %v2010
        %v2012 = vrot.slane %v2002, %v2011
        %v2014 = vunpack.c.l.s4 1983009808
        %v2015 = vunpack.c.0.s8 %v2014
        %v2016 = vlaneseq
        %v2017 = vshrl.u32 %v2016, 7
        %v2018 = vsub.s32 %v2015, %v2017
        %v2019 = vrot.slane %v2003, %v2018
        %v2021 = vunpack.c.l.s4 1983009808
        %v2022 = vunpack.c.0.s8 %v2021
        %v2023 = vlaneseq
        %v2024 = vshrl.u32 %v2023, 7
        %v2025 = vsub.s32 %v2022, %v2024
        %v2026 = vrot.slane %v2004, %v2025
        %v2028 = vunpack.c.l.s4 1983009808
        %v2029 = vunpack.c.0.s8 %v2028
        %v2030 = vlaneseq
        %v2031 = vshrl.u32 %v2030, 7
        %v2032 = vsub.s32 %v2029, %v2031
        %v2033 = vrot.slane %v2005, %v2032
        %v2034 = vcombine.low %v2012, %v2026
        %v2035 = vcombine.high %v2012, %v2026
        %v2036 = vcombine.low %v2019, %v2033
        %v2037 = vcombine.high %v2019, %v2033
        %v2038 = vcombine.low %v1636, %v1643
        %v2039 = vcombine.high %v1636, %v1643
        %v2040 = vcombine.low %v1650, %v1657
        %v2041 = vcombine.high %v1650, %v1657
        %v2043 = vunpack.c.l.s4 1983009808
        %v2044 = vunpack.c.0.s8 %v2043
        %v2045 = vlaneseq
        %v2046 = vshrl.u32 %v2045, 7
        %v2047 = vsub.s32 %v2044, %v2046
        %v2048 = vrot.slane %v2038, %v2047
        %v2050 = vunpack.c.l.s4 1983009808
        %v2051 = vunpack.c.0.s8 %v2050
        %v2052 = vlaneseq
        %v2053 = vshrl.u32 %v2052, 7
        %v2054 = vsub.s32 %v2051, %v2053
        %v2055 = vrot.slane %v2039, %v2054
        %v2057 = vunpack.c.l.s4 1983009808
        %v2058 = vunpack.c.0.s8 %v2057
        %v2059 = vlaneseq
        %v2060 = vshrl.u32 %v2059, 7
        %v2061 = vsub.s32 %v2058, %v2060
        %v2062 = vrot.slane %v2040, %v2061
        %v2064 = vunpack.c.l.s4 1983009808
        %v2065 = vunpack.c.0.s8 %v2064
        %v2066 = vlaneseq
        %v2067 = vshrl.u32 %v2066, 7
        %v2068 = vsub.s32 %v2065, %v2067
        %v2069 = vrot.slane %v2041, %v2068
        %v2070 = vcombine.low %v2048, %v2062
        %v2071 = vcombine.high %v2048, %v2062
        %v2072 = vcombine.low %v2055, %v2069
        %v2073 = vcombine.high %v2055, %v2069
        %v2074 = vcombine.low %v1637, %v1644
        %v2075 = vcombine.high %v1637, %v1644
        %v2076 = vcombine.low %v1651, %v1658
        %v2077 = vcombine.high %v1651, %v1658
        %v2079 = vunpack.c.l.s4 1983009808
        %v2080 = vunpack.c.0.s8 %v2079
        %v2081 = vlaneseq
        %v2082 = vshrl.u32 %v2081, 7
        %v2083 = vsub.s32 %v2080, %v2082
        %v2084 = vrot.slane %v2074, %v2083
        %v2086 = vunpack.c.l.s4 1983009808
        %v2087 = vunpack.c.0.s8 %v2086
        %v2088 = vlaneseq
        %v2089 = vshrl.u32 %v2088, 7
        %v2090 = vsub.s32 %v2087, %v2089
        %v2091 = vrot.slane %v2075, %v2090
        %v2093 = vunpack.c.l.s4 1983009808
        %v2094 = vunpack.c.0.s8 %v2093
        %v2095 = vlaneseq
        %v2096 = vshrl.u32 %v2095, 7
        %v2097 = vsub.s32 %v2094, %v2096
        %v2098 = vrot.slane %v2076, %v2097
        %v2100 = vunpack.c.l.s4 1983009808
        %v2101 = vunpack.c.0.s8 %v2100
        %v2102 = vlaneseq
        %v2103 = vshrl.u32 %v2102, 7
        %v2104 = vsub.s32 %v2101, %v2103
        %v2105 = vrot.slane %v2077, %v2104
        %v2106 = vcombine.low %v2084, %v2098
        %v2107 = vcombine.high %v2084, %v2098
        %v2108 = vcombine.low %v2091, %v2105
        %v2109 = vcombine.high %v2091, %v2105
        %v2110 = vcombine.low %v1638, %v1645
        %v2111 = vcombine.high %v1638, %v1645
        %v2112 = vcombine.low %v1652, %v1659
        %v2113 = vcombine.high %v1652, %v1659
        %v2115 = vunpack.c.l.s4 1983009808
        %v2116 = vunpack.c.0.s8 %v2115
        %v2117 = vlaneseq
        %v2118 = vshrl.u32 %v2117, 7
        %v2119 = vsub.s32 %v2116, %v2118
        %v2120 = vrot.slane %v2110, %v2119
        %v2122 = vunpack.c.l.s4 1983009808
        %v2123 = vunpack.c.0.s8 %v2122
        %v2124 = vlaneseq
        %v2125 = vshrl.u32 %v2124, 7
        %v2126 = vsub.s32 %v2123, %v2125
        %v2127 = vrot.slane %v2111, %v2126
        %v2129 = vunpack.c.l.s4 1983009808
        %v2130 = vunpack.c.0.s8 %v2129
        %v2131 = vlaneseq
        %v2132 = vshrl.u32 %v2131, 7
        %v2133 = vsub.s32 %v2130, %v2132
        %v2134 = vrot.slane %v2112, %v2133
        %v2136 = vunpack.c.l.s4 1983009808
        %v2137 = vunpack.c.0.s8 %v2136
        %v2138 = vlaneseq
        %v2139 = vshrl.u32 %v2138, 7
        %v2140 = vsub.s32 %v2137, %v2139
        %v2141 = vrot.slane %v2113, %v2140
        %v2142 = vcombine.low %v2120, %v2134
        %v2143 = vcombine.high %v2120, %v2134
        %v2144 = vcombine.low %v2127, %v2141
        %v2145 = vcombine.high %v2127, %v2141
        %v2146 = vcombine.low %v1639, %v1646
        %v2147 = vcombine.high %v1639, %v1646
        %v2148 = vcombine.low %v1653, %v1660
        %v2149 = vcombine.high %v1653, %v1660
        %v2151 = vunpack.c.l.s4 1983009808
        %v2152 = vunpack.c.0.s8 %v2151
        %v2153 = vlaneseq
        %v2154 = vshrl.u32 %v2153, 7
        %v2155 = vsub.s32 %v2152, %v2154
        %v2156 = vrot.slane %v2146, %v2155
        %v2158 = vunpack.c.l.s4 1983009808
        %v2159 = vunpack.c.0.s8 %v2158
        %v2160 = vlaneseq
        %v2161 = vshrl.u32 %v2160, 7
        %v2162 = vsub.s32 %v2159, %v2161
        %v2163 = vrot.slane %v2147, %v2162
        %v2165 = vunpack.c.l.s4 1983009808
        %v2166 = vunpack.c.0.s8 %v2165
        %v2167 = vlaneseq
        %v2168 = vshrl.u32 %v2167, 7
        %v2169 = vsub.s32 %v2166, %v2168
        %v2170 = vrot.slane %v2148, %v2169
        %v2172 = vunpack.c.l.s4 1983009808
        %v2173 = vunpack.c.0.s8 %v2172
        %v2174 = vlaneseq
        %v2175 = vshrl.u32 %v2174, 7
        %v2176 = vsub.s32 %v2173, %v2175
        %v2177 = vrot.slane %v2149, %v2176
        %v2178 = vcombine.low %v2156, %v2170
        %v2179 = vcombine.high %v2156, %v2170
        %v2180 = vcombine.low %v2163, %v2177
        %v2181 = vcombine.high %v2163, %v2177
        %v2182 = vcombine.low %v1640, %v1647
        %v2183 = vcombine.high %v1640, %v1647
        %v2184 = vcombine.low %v1654, %v1661
        %v2185 = vcombine.high %v1654, %v1661
        %v2187 = vunpack.c.l.s4 1983009808
        %v2188 = vunpack.c.0.s8 %v2187
        %v2189 = vlaneseq
        %v2190 = vshrl.u32 %v2189, 7
        %v2191 = vsub.s32 %v2188, %v2190
        %v2192 = vrot.slane %v2182, %v2191
        %v2194 = vunpack.c.l.s4 1983009808
        %v2195 = vunpack.c.0.s8 %v2194
        %v2196 = vlaneseq
        %v2197 = vshrl.u32 %v2196, 7
        %v2198 = vsub.s32 %v2195, %v2197
        %v2199 = vrot.slane %v2183, %v2198
        %v2201 = vunpack.c.l.s4 1983009808
        %v2202 = vunpack.c.0.s8 %v2201
        %v2203 = vlaneseq
        %v2204 = vshrl.u32 %v2203, 7
        %v2205 = vsub.s32 %v2202, %v2204
        %v2206 = vrot.slane %v2184, %v2205
        %v2208 = vunpack.c.l.s4 1983009808
        %v2209 = vunpack.c.0.s8 %v2208
        %v2210 = vlaneseq
        %v2211 = vshrl.u32 %v2210, 7
        %v2212 = vsub.s32 %v2209, %v2211
        %v2213 = vrot.slane %v2185, %v2212
        %v2214 = vcombine.low %v2192, %v2206
        %v2215 = vcombine.high %v2192, %v2206
        %v2216 = vcombine.low %v2199, %v2213
        %v2217 = vcombine.high %v2199, %v2213
        %v2218 = vcombine.low %v1641, %v1648
        %v2219 = vcombine.low %v1655, %v1662
        %v2221 = vunpack.c.l.s4 1983009808
        %v2222 = vunpack.c.0.s8 %v2221
        %v2223 = vlaneseq
        %v2224 = vshrl.u32 %v2223, 7
        %v2225 = vsub.s32 %v2222, %v2224
        %v2226 = vrot.slane %v2218, %v2225
        %v2228 = vunpack.c.l.s4 1983009808
        %v2229 = vunpack.c.0.s8 %v2228
        %v2230 = vlaneseq
        %v2231 = vshrl.u32 %v2230, 7
        %v2232 = vsub.s32 %v2229, %v2231
        %v2233 = vrot.slane %v2219, %v2232
        %v2234 = vcombine.low %v2226, %v2233
        %v2285 = vsel %vm1663, %v1801, 0.0
        %v2286 = vsel %vm1664, %v1802, 0.0
        %v2287 = vsel %vm1665, %v1803, 0.0
        %v2288 = vsel %vm1666, %v1804, 0.0
        %v2289 = vsel %vm1667, %v1837, 0.0
        %v2290 = vsel %vm1668, %v1838, 0.0
        %v2291 = vsel %vm1669, %v1839, 0.0
        %v2292 = vsel %vm1670, %v1840, 0.0
        %v2293 = vsel %vm1671, %v1873, 0.0
        %v2294 = vsel %vm1672, %v1874, 0.0
        %v2295 = vsel %vm1673, %v1875, 0.0
        %v2296 = vsel %vm1674, %v1876, 0.0
        %v2297 = vsel %vm1675, %v1909, 0.0
        %v2298 = vsel %vm1676, %v1910, 0.0
        %v2299 = vsel %vm1677, %v1911, 0.0
        %v2300 = vsel %vm1678, %v1912, 0.0
        %v2301 = vsel %vm1679, %v1945, 0.0
        %v2302 = vsel %vm1680, %v1946, 0.0
        %v2303 = vsel %vm1681, %v1947, 0.0
        %v2304 = vsel %vm1682, %v1948, 0.0
        %v2305 = vsel %vm1683, %v1981, 0.0
        %v2306 = vsel %vm1684, %v1982, 0.0
        %v2307 = vsel %vm1685, %v1983, 0.0
        %v2308 = vsel %vm1686, %v1984, 0.0
        %v2309 = vsel %vm1687, %v2001, 0.0
        %v2310 = vsel %vm1688, %v2034, 0.0
        %v2311 = vsel %vm1689, %v2035, 0.0
        %v2312 = vsel %vm1690, %v2036, 0.0
        %v2313 = vsel %vm1691, %v2037, 0.0
        %v2314 = vsel %vm1692, %v2070, 0.0
        %v2315 = vsel %vm1693, %v2071, 0.0
        %v2316 = vsel %vm1694, %v2072, 0.0
        %v2317 = vsel %vm1695, %v2073, 0.0
        %v2318 = vsel %vm1696, %v2106, 0.0
        %v2319 = vsel %vm1697, %v2107, 0.0
        %v2320 = vsel %vm1698, %v2108, 0.0
        %v2321 = vsel %vm1699, %v2109, 0.0
        %v2322 = vsel %vm1700, %v2142, 0.0
        %v2323 = vsel %vm1701, %v2143, 0.0
        %v2324 = vsel %vm1702, %v2144, 0.0
        %v2325 = vsel %vm1703, %v2145, 0.0
        %v2326 = vsel %vm1704, %v2178, 0.0
        %v2327 = vsel %vm1705, %v2179, 0.0
        %v2328 = vsel %vm1706, %v2180, 0.0
        %v2329 = vsel %vm1707, %v2181, 0.0
        %v2330 = vsel %vm1708, %v2214, 0.0
        %v2331 = vsel %vm1709, %v2215, 0.0
        %v2332 = vsel %vm1710, %v2216, 0.0
        %v2333 = vsel %vm1711, %v2217, 0.0
        %v2334 = vsel %vm1712, %v2234, 0.0
        %v2335 = vld [vmem:[#allocation2] sm:$0xff]
        %v2336 = vld [vmem:[#allocation2 + $0x8] sm:$0xff]
        %v2337 = vld [vmem:[#allocation2 + $0x10] sm:$0xff]
        %v2338 = vld [vmem:[#allocation2 + $0x18] sm:$0x1]
        %v2339 = vadd.f32 %v2285, %v2310
        %v2340 = vrot.slane %v2339, 4
        %v2341 = vadd.f32 %v2339, %v2340
        %v2342 = vrot.slane %v2341, 2
        %v2343 = vadd.f32 %v2341, %v2342
        %v2344 = vrot.slane %v2343, 1
        %v2345 = vadd.f32 %v2343, %v2344
        %v2346 = vadd.f32 %v2286, %v2311
        %v2347 = vrot.slane %v2346, 4
        %v2348 = vadd.f32 %v2346, %v2347
        %v2349 = vrot.slane %v2348, 2
        %v2350 = vadd.f32 %v2348, %v2349
        %v2351 = vrot.slane %v2350, 1
        %v2352 = vadd.f32 %v2350, %v2351
        %v2353 = vadd.f32 %v2287, %v2312
        %v2354 = vrot.slane %v2353, 4
        %v2355 = vadd.f32 %v2353, %v2354
        %v2356 = vrot.slane %v2355, 2
        %v2357 = vadd.f32 %v2355, %v2356
        %v2358 = vrot.slane %v2357, 1
        %v2359 = vadd.f32 %v2357, %v2358
        %v2360 = vadd.f32 %v2288, %v2313
        %v2361 = vrot.slane %v2360, 4
        %v2362 = vadd.f32 %v2360, %v2361
        %v2363 = vrot.slane %v2362, 2
        %v2364 = vadd.f32 %v2362, %v2363
        %v2365 = vrot.slane %v2364, 1
        %v2366 = vadd.f32 %v2364, %v2365
        %v2367 = vadd.f32 %v2289, %v2314
        %v2368 = vrot.slane %v2367, 4
        %v2369 = vadd.f32 %v2367, %v2368
        %v2370 = vrot.slane %v2369, 2
        %v2371 = vadd.f32 %v2369, %v2370
        %v2372 = vrot.slane %v2371, 1
        %v2373 = vadd.f32 %v2371, %v2372
        %v2374 = vadd.f32 %v2290, %v2315
        %v2375 = vrot.slane %v2374, 4
        %v2376 = vadd.f32 %v2374, %v2375
        %v2377 = vrot.slane %v2376, 2
        %v2378 = vadd.f32 %v2376, %v2377
        %v2379 = vrot.slane %v2378, 1
        %v2380 = vadd.f32 %v2378, %v2379
        %v2381 = vadd.f32 %v2291, %v2316
        %v2382 = vrot.slane %v2381, 4
        %v2383 = vadd.f32 %v2381, %v2382
        %v2384 = vrot.slane %v2383, 2
        %v2385 = vadd.f32 %v2383, %v2384
        %v2386 = vrot.slane %v2385, 1
        %v2387 = vadd.f32 %v2385, %v2386
        %v2388 = vadd.f32 %v2292, %v2317
        %v2389 = vrot.slane %v2388, 4
        %v2390 = vadd.f32 %v2388, %v2389
        %v2391 = vrot.slane %v2390, 2
        %v2392 = vadd.f32 %v2390, %v2391
        %v2393 = vrot.slane %v2392, 1
        %v2394 = vadd.f32 %v2392, %v2393
        %v2395 = vadd.f32 %v2293, %v2318
        %v2396 = vrot.slane %v2395, 4
        %v2397 = vadd.f32 %v2395, %v2396
        %v2398 = vrot.slane %v2397, 2
        %v2399 = vadd.f32 %v2397, %v2398
        %v2400 = vrot.slane %v2399, 1
        %v2401 = vadd.f32 %v2399, %v2400
        %v2402 = vadd.f32 %v2294, %v2319
        %v2403 = vrot.slane %v2402, 4
        %v2404 = vadd.f32 %v2402, %v2403
        %v2405 = vrot.slane %v2404, 2
        %v2406 = vadd.f32 %v2404, %v2405
        %v2407 = vrot.slane %v2406, 1
        %v2408 = vadd.f32 %v2406, %v2407
        %v2409 = vadd.f32 %v2295, %v2320
        %v2410 = vrot.slane %v2409, 4
        %v2411 = vadd.f32 %v2409, %v2410
        %v2412 = vrot.slane %v2411, 2
        %v2413 = vadd.f32 %v2411, %v2412
        %v2414 = vrot.slane %v2413, 1
        %v2415 = vadd.f32 %v2413, %v2414
        %v2416 = vadd.f32 %v2296, %v2321
        %v2417 = vrot.slane %v2416, 4
        %v2418 = vadd.f32 %v2416, %v2417
        %v2419 = vrot.slane %v2418, 2
        %v2420 = vadd.f32 %v2418, %v2419
        %v2421 = vrot.slane %v2420, 1
        %v2422 = vadd.f32 %v2420, %v2421
        %v2423 = vadd.f32 %v2297, %v2322
        %v2424 = vrot.slane %v2423, 4
        %v2425 = vadd.f32 %v2423, %v2424
        %v2426 = vrot.slane %v2425, 2
        %v2427 = vadd.f32 %v2425, %v2426
        %v2428 = vrot.slane %v2427, 1
        %v2429 = vadd.f32 %v2427, %v2428
        %v2430 = vadd.f32 %v2298, %v2323
        %v2431 = vrot.slane %v2430, 4
        %v2432 = vadd.f32 %v2430, %v2431
        %v2433 = vrot.slane %v2432, 2
        %v2434 = vadd.f32 %v2432, %v2433
        %v2435 = vrot.slane %v2434, 1
        %v2436 = vadd.f32 %v2434, %v2435
        %v2437 = vadd.f32 %v2299, %v2324
        %v2438 = vrot.slane %v2437, 4
        %v2439 = vadd.f32 %v2437, %v2438
        %v2440 = vrot.slane %v2439, 2
        %v2441 = vadd.f32 %v2439, %v2440
        %v2442 = vrot.slane %v2441, 1
        %v2443 = vadd.f32 %v2441, %v2442
        %v2444 = vadd.f32 %v2300, %v2325
        %v2445 = vrot.slane %v2444, 4
        %v2446 = vadd.f32 %v2444, %v2445
        %v2447 = vrot.slane %v2446, 2
        %v2448 = vadd.f32 %v2446, %v2447
        %v2449 = vrot.slane %v2448, 1
        %v2450 = vadd.f32 %v2448, %v2449
        %v2451 = vadd.f32 %v2301, %v2326
        %v2452 = vrot.slane %v2451, 4
        %v2453 = vadd.f32 %v2451, %v2452
        %v2454 = vrot.slane %v2453, 2
        %v2455 = vadd.f32 %v2453, %v2454
        %v2456 = vrot.slane %v2455, 1
        %v2457 = vadd.f32 %v2455, %v2456
        %v2458 = vadd.f32 %v2302, %v2327
        %v2459 = vrot.slane %v2458, 4
        %v2460 = vadd.f32 %v2458, %v2459
        %v2461 = vrot.slane %v2460, 2
        %v2462 = vadd.f32 %v2460, %v2461
        %v2463 = vrot.slane %v2462, 1
        %v2464 = vadd.f32 %v2462, %v2463
        %v2465 = vadd.f32 %v2303, %v2328
        %v2466 = vrot.slane %v2465, 4
        %v2467 = vadd.f32 %v2465, %v2466
        %v2468 = vrot.slane %v2467, 2
        %v2469 = vadd.f32 %v2467, %v2468
        %v2470 = vrot.slane %v2469, 1
        %v2471 = vadd.f32 %v2469, %v2470
        %v2472 = vadd.f32 %v2304, %v2329
        %v2473 = vrot.slane %v2472, 4
        %v2474 = vadd.f32 %v2472, %v2473
        %v2475 = vrot.slane %v2474, 2
        %v2476 = vadd.f32 %v2474, %v2475
        %v2477 = vrot.slane %v2476, 1
        %v2478 = vadd.f32 %v2476, %v2477
        %v2479 = vadd.f32 %v2305, %v2330
        %v2480 = vrot.slane %v2479, 4
        %v2481 = vadd.f32 %v2479, %v2480
        %v2482 = vrot.slane %v2481, 2
        %v2483 = vadd.f32 %v2481, %v2482
        %v2484 = vrot.slane %v2483, 1
        %v2485 = vadd.f32 %v2483, %v2484
        %v2486 = vadd.f32 %v2306, %v2331
        %v2487 = vrot.slane %v2486, 4
        %v2488 = vadd.f32 %v2486, %v2487
        %v2489 = vrot.slane %v2488, 2
        %v2490 = vadd.f32 %v2488, %v2489
        %v2491 = vrot.slane %v2490, 1
        %v2492 = vadd.f32 %v2490, %v2491
        %v2493 = vadd.f32 %v2307, %v2332
        %v2494 = vrot.slane %v2493, 4
        %v2495 = vadd.f32 %v2493, %v2494
        %v2496 = vrot.slane %v2495, 2
        %v2497 = vadd.f32 %v2495, %v2496
        %v2498 = vrot.slane %v2497, 1
        %v2499 = vadd.f32 %v2497, %v2498
        %v2500 = vadd.f32 %v2308, %v2333
        %v2501 = vrot.slane %v2500, 4
        %v2502 = vadd.f32 %v2500, %v2501
        %v2503 = vrot.slane %v2502, 2
        %v2504 = vadd.f32 %v2502, %v2503
        %v2505 = vrot.slane %v2504, 1
        %v2506 = vadd.f32 %v2504, %v2505
        %v2507 = vadd.f32 %v2309, %v2334
        %v2508 = vrot.slane %v2507, 4
        %v2509 = vadd.f32 %v2507, %v2508
        %v2510 = vrot.slane %v2509, 2
        %v2511 = vadd.f32 %v2509, %v2510
        %v2512 = vrot.slane %v2511, 1
        %v2513 = vadd.f32 %v2511, %v2512
        %v2539 = vcombine.low %v2345, %v2352
        %v2540 = vcombine.low %v2359, %v2366
        %v2541 = vcombine.low %v2373, %v2380
        %v2542 = vcombine.low %v2387, %v2394
        %v2544 = vunpack.c.l.s4 1966171168
        %v2545 = vunpack.c.0.s8 %v2544
        %v2546 = vlaneseq
        %v2547 = vshrl.u32 %v2546, 7
        %v2548 = vsub.s32 %v2545, %v2547
        %v2549 = vrot.slane %v2539, %v2548
        %v2551 = vunpack.c.l.s4 1966171168
        %v2552 = vunpack.c.0.s8 %v2551
        %v2553 = vlaneseq
        %v2554 = vshrl.u32 %v2553, 7
        %v2555 = vsub.s32 %v2552, %v2554
        %v2556 = vrot.slane %v2540, %v2555
        %v2558 = vunpack.c.l.s4 1966171168
        %v2559 = vunpack.c.0.s8 %v2558
        %v2560 = vlaneseq
        %v2561 = vshrl.u32 %v2560, 7
        %v2562 = vsub.s32 %v2559, %v2561
        %v2563 = vrot.slane %v2541, %v2562
        %v2565 = vunpack.c.l.s4 1966171168
        %v2566 = vunpack.c.0.s8 %v2565
        %v2567 = vlaneseq
        %v2568 = vshrl.u32 %v2567, 7
        %v2569 = vsub.s32 %v2566, %v2568
        %v2570 = vrot.slane %v2542, %v2569
        %v2571 = vcombine.low %v2549, %v2556
        %v2572 = vcombine.low %v2563, %v2570
        %v2574 = vunpack.c.l.s4 1966171168
        %v2575 = vunpack.c.0.s8 %v2574
        %v2576 = vlaneseq
        %v2577 = vshrl.u32 %v2576, 7
        %v2578 = vsub.s32 %v2575, %v2577
        %v2579 = vrot.slane %v2571, %v2578
        %v2581 = vunpack.c.l.s4 1966171168
        %v2582 = vunpack.c.0.s8 %v2581
        %v2583 = vlaneseq
        %v2584 = vshrl.u32 %v2583, 7
        %v2585 = vsub.s32 %v2582, %v2584
        %v2586 = vrot.slane %v2572, %v2585
        %v2587 = vcombine.low %v2579, %v2586
        %v2588 = vcombine.low %v2401, %v2408
        %v2589 = vcombine.low %v2415, %v2422
        %v2590 = vcombine.low %v2429, %v2436
        %v2591 = vcombine.low %v2443, %v2450
        %v2593 = vunpack.c.l.s4 1966171168
        %v2594 = vunpack.c.0.s8 %v2593
        %v2595 = vlaneseq
        %v2596 = vshrl.u32 %v2595, 7
        %v2597 = vsub.s32 %v2594, %v2596
        %v2598 = vrot.slane %v2588, %v2597
        %v2600 = vunpack.c.l.s4 1966171168
        %v2601 = vunpack.c.0.s8 %v2600
        %v2602 = vlaneseq
        %v2603 = vshrl.u32 %v2602, 7
        %v2604 = vsub.s32 %v2601, %v2603
        %v2605 = vrot.slane %v2589, %v2604
        %v2607 = vunpack.c.l.s4 1966171168
        %v2608 = vunpack.c.0.s8 %v2607
        %v2609 = vlaneseq
        %v2610 = vshrl.u32 %v2609, 7
        %v2611 = vsub.s32 %v2608, %v2610
        %v2612 = vrot.slane %v2590, %v2611
        %v2614 = vunpack.c.l.s4 1966171168
        %v2615 = vunpack.c.0.s8 %v2614
        %v2616 = vlaneseq
        %v2617 = vshrl.u32 %v2616, 7
        %v2618 = vsub.s32 %v2615, %v2617
        %v2619 = vrot.slane %v2591, %v2618
        %v2620 = vcombine.low %v2598, %v2605
        %v2621 = vcombine.low %v2612, %v2619
        %v2623 = vunpack.c.l.s4 1966171168
        %v2624 = vunpack.c.0.s8 %v2623
        %v2625 = vlaneseq
        %v2626 = vshrl.u32 %v2625, 7
        %v2627 = vsub.s32 %v2624, %v2626
        %v2628 = vrot.slane %v2620, %v2627
        %v2630 = vunpack.c.l.s4 1966171168
        %v2631 = vunpack.c.0.s8 %v2630
        %v2632 = vlaneseq
        %v2633 = vshrl.u32 %v2632, 7
        %v2634 = vsub.s32 %v2631, %v2633
        %v2635 = vrot.slane %v2621, %v2634
        %v2636 = vcombine.low %v2628, %v2635
        %v2637 = vcombine.low %v2457, %v2464
        %v2638 = vcombine.low %v2471, %v2478
        %v2639 = vcombine.low %v2485, %v2492
        %v2640 = vcombine.low %v2499, %v2506
        %v2642 = vunpack.c.l.s4 1966171168
        %v2643 = vunpack.c.0.s8 %v2642
        %v2644 = vlaneseq
        %v2645 = vshrl.u32 %v2644, 7
        %v2646 = vsub.s32 %v2643, %v2645
        %v2647 = vrot.slane %v2637, %v2646
        %v2649 = vunpack.c.l.s4 1966171168
        %v2650 = vunpack.c.0.s8 %v2649
        %v2651 = vlaneseq
        %v2652 = vshrl.u32 %v2651, 7
        %v2653 = vsub.s32 %v2650, %v2652
        %v2654 = vrot.slane %v2638, %v2653
        %v2656 = vunpack.c.l.s4 1966171168
        %v2657 = vunpack.c.0.s8 %v2656
        %v2658 = vlaneseq
        %v2659 = vshrl.u32 %v2658, 7
        %v2660 = vsub.s32 %v2657, %v2659
        %v2661 = vrot.slane %v2639, %v2660
        %v2663 = vunpack.c.l.s4 1966171168
        %v2664 = vunpack.c.0.s8 %v2663
        %v2665 = vlaneseq
        %v2666 = vshrl.u32 %v2665, 7
        %v2667 = vsub.s32 %v2664, %v2666
        %v2668 = vrot.slane %v2640, %v2667
        %v2669 = vcombine.low %v2647, %v2654
        %v2670 = vcombine.low %v2661, %v2668
        %v2672 = vunpack.c.l.s4 1966171168
        %v2673 = vunpack.c.0.s8 %v2672
        %v2674 = vlaneseq
        %v2675 = vshrl.u32 %v2674, 7
        %v2676 = vsub.s32 %v2673, %v2675
        %v2677 = vrot.slane %v2669, %v2676
        %v2679 = vunpack.c.l.s4 1966171168
        %v2680 = vunpack.c.0.s8 %v2679
        %v2681 = vlaneseq
        %v2682 = vshrl.u32 %v2681, 7
        %v2683 = vsub.s32 %v2680, %v2682
        %v2684 = vrot.slane %v2670, %v2683
        %v2685 = vcombine.low %v2677, %v2684
        %v2687 = vunpack.c.l.s4 1966171168
        %v2688 = vunpack.c.0.s8 %v2687
        %v2689 = vlaneseq
        %v2690 = vshrl.u32 %v2689, 7
        %v2691 = vsub.s32 %v2688, %v2690
        %v2692 = vrot.slane %v2513, %v2691
        %v2694 = vunpack.c.l.s4 1966171168
        %v2695 = vunpack.c.0.s8 %v2694
        %v2696 = vlaneseq
        %v2697 = vshrl.u32 %v2696, 7
        %v2698 = vsub.s32 %v2695, %v2697
        %v2699 = vrot.slane %v2692, %v2698
        %v2704 = vadd.f32 %v2335, %v2587
        %v2705 = vadd.f32 %v2336, %v2636
        %v2706 = vadd.f32 %v2337, %v2685
        %v2707 = vadd.f32 %v2338, %v2699
        %2708 = vst [vmem:[#allocation2] sm:$0xff] %v2704
        %2709 = vst [vmem:[#allocation2 + $0x8] sm:$0xff] %v2705
        %2710 = vst [vmem:[#allocation2 + $0x10] sm:$0xff] %v2706
        %v2711 = vlaneseq
        %vm2712 = vcmp.ge.s32.totalorder %v2711, 0
        %vm2713 = vcmp.lt.s32.totalorder %v2711, 128
        %vm2714 = vmand %vm2712, %vm2713
        %2715 = vst.msk [vmem:[#allocation2 + $0x18] sm:$0x1] %vm2714, %v2707
        // Predicated region
        $region49: #{tpu_custom_call.1} parent=31 // pred_check
          %p2716 = pneg %p282
        $region50: #{tpu_custom_call.1} parent=31 // pred_check_branch
          %2718 = sbr.rel (%p2716) target = $region52
        $region51: #{tpu_custom_call.1} parent=31 // pred_region
          %v2719 = vld [vmem:[#allocation2] sm:$0xff]
          %v2720 = vld [vmem:[#allocation2 + $0x8] sm:$0xff]
          %v2721 = vld [vmem:[#allocation2 + $0x10] sm:$0xff]
          %v2722 = vld [vmem:[#allocation2 + $0x18] sm:$0x1]
          %v2727 = vlaneseq
          %v2728 = vshrl.u32 %v2727, 7
          %v2729 = vsub.s32 0, %v2728
          %v2730 = vrot.slane %v2719, %v2729
          %v2731 = vlaneseq
          %v2732 = vshrl.u32 %v2731, 7
          %v2733 = vsub.s32 1, %v2732
          %v2734 = vrot.slane %v2719, %v2733
          %v2735 = vlaneseq
          %v2736 = vshrl.u32 %v2735, 7
          %v2737 = vsub.s32 2, %v2736
          %v2738 = vrot.slane %v2719, %v2737
          %v2739 = vlaneseq
          %v2740 = vshrl.u32 %v2739, 7
          %v2741 = vsub.s32 3, %v2740
          %v2742 = vrot.slane %v2719, %v2741
          %v2743 = vlaneseq
          %v2744 = vshrl.u32 %v2743, 7
          %v2745 = vsub.s32 4, %v2744
          %v2746 = vrot.slane %v2719, %v2745
          %v2747 = vlaneseq
          %v2748 = vshrl.u32 %v2747, 7
          %v2749 = vsub.s32 5, %v2748
          %v2750 = vrot.slane %v2719, %v2749
          %v2751 = vlaneseq
          %v2752 = vshrl.u32 %v2751, 7
          %v2753 = vsub.s32 6, %v2752
          %v2754 = vrot.slane %v2719, %v2753
          %v2755 = vlaneseq
          %v2756 = vshrl.u32 %v2755, 7
          %v2757 = vsub.s32 7, %v2756
          %v2758 = vrot.slane %v2719, %v2757
          %v2759 = vlaneseq
          %v2760 = vshrl.u32 %v2759, 7
          %v2761 = vsub.s32 0, %v2760
          %v2762 = vrot.slane %v2720, %v2761
          %v2763 = vlaneseq
          %v2764 = vshrl.u32 %v2763, 7
          %v2765 = vsub.s32 1, %v2764
          %v2766 = vrot.slane %v2720, %v2765
          %v2767 = vlaneseq
          %v2768 = vshrl.u32 %v2767, 7
          %v2769 = vsub.s32 2, %v2768
          %v2770 = vrot.slane %v2720, %v2769
          %v2771 = vlaneseq
          %v2772 = vshrl.u32 %v2771, 7
          %v2773 = vsub.s32 3, %v2772
          %v2774 = vrot.slane %v2720, %v2773
          %v2775 = vlaneseq
          %v2776 = vshrl.u32 %v2775, 7
          %v2777 = vsub.s32 4, %v2776
          %v2778 = vrot.slane %v2720, %v2777
          %v2779 = vlaneseq
          %v2780 = vshrl.u32 %v2779, 7
          %v2781 = vsub.s32 5, %v2780
          %v2782 = vrot.slane %v2720, %v2781
          %v2783 = vlaneseq
          %v2784 = vshrl.u32 %v2783, 7
          %v2785 = vsub.s32 6, %v2784
          %v2786 = vrot.slane %v2720, %v2785
          %v2787 = vlaneseq
          %v2788 = vshrl.u32 %v2787, 7
          %v2789 = vsub.s32 7, %v2788
          %v2790 = vrot.slane %v2720, %v2789
          %v2791 = vlaneseq
          %v2792 = vshrl.u32 %v2791, 7
          %v2793 = vsub.s32 0, %v2792
          %v2794 = vrot.slane %v2721, %v2793
          %v2795 = vlaneseq
          %v2796 = vshrl.u32 %v2795, 7
          %v2797 = vsub.s32 1, %v2796
          %v2798 = vrot.slane %v2721, %v2797
          %v2799 = vlaneseq
          %v2800 = vshrl.u32 %v2799, 7
          %v2801 = vsub.s32 2, %v2800
          %v2802 = vrot.slane %v2721, %v2801
          %v2803 = vlaneseq
          %v2804 = vshrl.u32 %v2803, 7
          %v2805 = vsub.s32 3, %v2804
          %v2806 = vrot.slane %v2721, %v2805
          %v2807 = vlaneseq
          %v2808 = vshrl.u32 %v2807, 7
          %v2809 = vsub.s32 4, %v2808
          %v2810 = vrot.slane %v2721, %v2809
          %v2811 = vlaneseq
          %v2812 = vshrl.u32 %v2811, 7
          %v2813 = vsub.s32 5, %v2812
          %v2814 = vrot.slane %v2721, %v2813
          %v2815 = vlaneseq
          %v2816 = vshrl.u32 %v2815, 7
          %v2817 = vsub.s32 6, %v2816
          %v2818 = vrot.slane %v2721, %v2817
          %v2819 = vlaneseq
          %v2820 = vshrl.u32 %v2819, 7
          %v2821 = vsub.s32 7, %v2820
          %v2822 = vrot.slane %v2721, %v2821
          %v2823 = vlaneseq
          %v2824 = vshrl.u32 %v2823, 7
          %v2825 = vsub.s32 0, %v2824
          %v2826 = vrot.slane %v2722, %v2825
          %v2852 = vsel %vm532, %v2730, 0.0
          %v2853 = vsel %vm532, %v2734, 0.0
          %v2854 = vadd.f32 %v2852, %v2853
          %v2855 = vsel %vm532, %v2738, 0.0
          %v2856 = vadd.f32 %v2854, %v2855
          %v2857 = vsel %vm532, %v2742, 0.0
          %v2858 = vadd.f32 %v2856, %v2857
          %v2859 = vsel %vm532, %v2746, 0.0
          %v2860 = vadd.f32 %v2858, %v2859
          %v2861 = vsel %vm532, %v2750, 0.0
          %v2862 = vadd.f32 %v2860, %v2861
          %v2863 = vsel %vm532, %v2754, 0.0
          %v2864 = vadd.f32 %v2862, %v2863
          %v2865 = vsel %vm532, %v2758, 0.0
          %v2866 = vadd.f32 %v2864, %v2865
          %v2867 = vsel %vm532, %v2762, 0.0
          %v2868 = vadd.f32 %v2866, %v2867
          %v2869 = vsel %vm532, %v2766, 0.0
          %v2870 = vadd.f32 %v2868, %v2869
          %v2871 = vsel %vm532, %v2770, 0.0
          %v2872 = vadd.f32 %v2870, %v2871
          %v2873 = vsel %vm532, %v2774, 0.0
          %v2874 = vadd.f32 %v2872, %v2873
          %v2875 = vsel %vm532, %v2778, 0.0
          %v2876 = vadd.f32 %v2874, %v2875
          %v2877 = vsel %vm532, %v2782, 0.0
          %v2878 = vadd.f32 %v2876, %v2877
          %v2879 = vsel %vm532, %v2786, 0.0
          %v2880 = vadd.f32 %v2878, %v2879
          %v2881 = vsel %vm532, %v2790, 0.0
          %v2882 = vadd.f32 %v2880, %v2881
          %v2883 = vsel %vm532, %v2794, 0.0
          %v2884 = vadd.f32 %v2882, %v2883
          %v2885 = vsel %vm532, %v2798, 0.0
          %v2886 = vadd.f32 %v2884, %v2885
          %v2887 = vsel %vm532, %v2802, 0.0
          %v2888 = vadd.f32 %v2886, %v2887
          %v2889 = vsel %vm532, %v2806, 0.0
          %v2890 = vadd.f32 %v2888, %v2889
          %v2891 = vsel %vm532, %v2810, 0.0
          %v2892 = vadd.f32 %v2890, %v2891
          %v2893 = vsel %vm532, %v2814, 0.0
          %v2894 = vadd.f32 %v2892, %v2893
          %v2895 = vsel %vm532, %v2818, 0.0
          %v2896 = vadd.f32 %v2894, %v2895
          %v2897 = vsel %vm532, %v2822, 0.0
          %v2898 = vadd.f32 %v2896, %v2897
          %v2899 = vsel %vm532, %v2826, 0.0
          %v2900 = vadd.f32 %v2898, %v2899
          %2901 = vadd.xlane.f32.xlu0 %v2900
          %v2902 = vpop.xlane.xlu0 %2901
          %v2903 = vrot.slane %v2902, 4
          %v2904 = vadd.f32 %v2902, %v2903
          %v2905 = vrot.slane %v2904, 2
          %v2906 = vadd.f32 %v2904, %v2905
          %v2907 = vrot.slane %v2906, 1
          %v2908 = vadd.f32 %v2906, %v2907
          %s2909 = vtos %v2908
          %v2910 = vstv %s2909
          %2911 = vst [vmem:[%s272] sm:$0xff] %v2910
        $region52: #{tpu_custom_call.1} parent=31 // pred_fallthru
          _
        %s2912 = sand.u32 %s124, 1
        %s2913 = scalar_lea.sflag [#allocation5], %s2912
        %s2914 = sand.u32 %s124, 1
        %s2915 = smul.addr %s2914, 8
        %s2916 = scalar_lea.vmem [#allocation9], %s2915
        // Predicated region
        $region53: #{tpu_custom_call.1} parent=31 // pred_check
          %p2917 = pneg %p134
        $region54: #{tpu_custom_call.1} parent=31 // pred_check_branch
          %2919 = sbr.rel (%p2917) target = $region56
        $region55: #{tpu_custom_call.1} parent=31 // pred_region
          %s2921 = ssub.s32 128, 128
          %2922 = vsyncadd %s2913, %s2921
          %s2923 = smul.addr %s27, 128
          %s2924 = scalar_lea.hbm %s3, %s2923
          %s2926 = sshll.u32 %s2916, 4
          %s2927 = int_to_ptr.vmem [resolvable:$true] %s2926
          %2929 = dma.vmem_to_hbm [thread:$0]  %s2927, 128, %s2924, %s2913
        $region56: #{tpu_custom_call.1} parent=31 // pred_fallthru
          _
      $region32: #{tpu_custom_call.1} parent=5 // pred_fallthru
        _
      %p2930 = scmp.le.s32.totalorder 2, %s18
      // Predicated region
      $region57: #{tpu_custom_call.1} parent=5 // pred_check
        %p2931 = pneg %p2930
      $region58: #{tpu_custom_call.1} parent=5 // pred_check_branch
        %2933 = sbr.rel (%p2931) target = $region60
      $region59: #{tpu_custom_call.1} parent=5 // pred_region
        %s2934 = ssub.s32 %s18, 2
        // Predicated region
        $region61: #{tpu_custom_call.1} parent=59 // pred_check
          %p2935 = pneg %p140
        $region62: #{tpu_custom_call.1} parent=59 // pred_check_branch
          %2937 = sbr.rel (%p2935) target = $region64
        $region63: #{tpu_custom_call.1} parent=59 // pred_region
          %s2938 = sand.u32 %s125, 1
          %s2939 = scalar_lea.sflag [#allocation5], %s2938
          %s2940 = sand.u32 %s125, 1
          %s2941 = smul.addr %s2940, 8
          %s2942 = scalar_lea.vmem [#allocation9], %s2941
          %2943 = dma.done %s2939, 128
        $region64: #{tpu_custom_call.1} parent=59 // pred_fallthru
          _
      $region60: #{tpu_custom_call.1} parent=5 // pred_fallthru
        _
    $region6: #{tpu_custom_call.1} parent=1 // loop_footer
      %s22 = sadd.s32 1, %s18
    $region7: #{tpu_custom_call.1} parent=1 // loop_footer_branch
      %17 = sbr.rel target = $region3
    $region8: #{tpu_custom_call.1} parent=1 // loop_exit
      _
    %2944 = vsyncpa [#allocation4], 1
    %s2945 = scalar_lea.sflag [#allocation4], 1
    %2946 = vsyncpa %s2945, 1
    %2947 = vsyncpa [#allocation7], 1
    %s2948 = scalar_lea.sflag [#allocation7], 1
    %2949 = vsyncpa %s2948, 1
    %2950 = vsyncpa [#allocation5], 1
    %s2951 = scalar_lea.sflag [#allocation5], 1
    %2952 = vsyncpa %s2951, 1

</llo_original>
